<compile_context>
chip_gen: v7x
topology: tpu7x:2x2x1
jax: 0.10.0
libtpu: 0.0.40
codegen_flags: <defaults>
</compile_context>

<pallas_src>
from enum import Enum
import functools

import jax
import jax.numpy as jnp
from jax.experimental import pallas as pl
from jax.experimental.pallas import tpu as pltpu


class Position(Enum):
    INNER = "inner"
    OUTER = "outer"
    MIDDLE = "middle"


_VMEM_LIMIT = 64 * 1024 * 1024   # above every scoped default, <= v7x physical VMEM


def _round_up(x, m):
    return (x + m - 1) // m * m


def _pick_co_tile(cp):
    return 256 if cp % 256 == 0 else 128


def _pick_row_tile(ho, wo2, tcp):
    """Output rows per grid step.
       * th divides Ho
       * tm2 = th*wo2 is a multiple of 8 (or th == Ho -> full-dim block)
       * the two f32 (tm2, tcp) accumulators stay <= ~128 KiB when possible."""
    budget_rows = max(1, (128 * 1024) // (8 * tcp))      # th*wo2 budget
    cands = [d for d in range(1, ho + 1)
             if ho % d == 0 and ((d * wo2) % 8 == 0 or d == ho)]
    within = [d for d in cands if d * wo2 <= budget_rows]
    return max(within) if within else min(cands)         # never blow up past budget


def _pick_affine_rows(total):
    """Row block for the HBM-bound affine pass: large (<=2048), divides total, mult of 8."""
    if total % 8:
        return total
    best = 8
    for d in range(8, min(total, 2048) + 1, 8):
        if total % d == 0:
            best = d
    return best


# ----------------------------------------------------------------------------
# Pallas kernels
# ----------------------------------------------------------------------------
def _conv_kernel(x00_ref, x01_ref, x10_ref, x11_ref, w_ref, b_ref, y_ref,
                 *stats_refs, th, wo2, cin, with_stats):
    """4x4 / stride-2 conv as 8 MXU matmuls with K = 4*Cin (taps packed into K).

    x{p}{q}_ref : (Ho+1, Wo/2, 4*Cin) bf16  window-packed phase (row parity p,
                  output-column parity q); resident per batch element.
    w_ref       : (4, 4*Cin, tcp)     bf16  (kh, kw*Cin+ci, co)
    b_ref       : (1, tcp)            f32
    y_ref       : (2, tm2, tcp)             one row tile, both column parities
    stats_refs  : optional (1, 8, tcp) per-batch sum / sum-of-squares accumulators
    """
    tm2 = th * wo2
    k4 = 4 * cin
    tcp = y_ref.shape[-1]
    ho0 = pl.program_id(2) * th
    phases = ((x00_ref, x01_ref), (x10_ref, x11_ref))

    bias = b_ref[...]                                          # (1, tcp) f32
    acc = [jnp.broadcast_to(bias, (tm2, tcp)),                 # bias folded into init
           jnp.broadcast_to(bias, (tm2, tcp))]
    for p in range(2):                                         # input row parity
        for q in range(2):                                     # output column parity
            slab = phases[p][q][pl.ds(ho0, th + 1)]            # (th+1, wo2, 4*cin) bf16
            for dh in range(2):                                # kh = 2*dh + p
                lhs = slab[dh:dh + th].reshape(tm2, k4)        # leading-dim merge only
                acc[q] = acc[q] + jnp.dot(lhs, w_ref[2 * dh + p],
                                          preferred_element_type=jnp.float32)

    y_ref[0, :, :] = acc[0].astype(y_ref.dtype)
    y_ref[1, :, :] = acc[1].astype(y_ref.dtype)

    if with_stats:                                             # fused BatchNorm pass 1
        sum_ref, ssq_ref = stats_refs

        @pl.when(pl.program_id(2) == 0)
        def _():
            sum_ref[...] = jnp.zeros_like(sum_ref)
            ssq_ref[...] = jnp.zeros_like(ssq_ref)

        s = (jnp.sum(acc[0], axis=0, keepdims=True)
             + jnp.sum(acc[1], axis=0, keepdims=True))         # (1, tcp) f32
        ss = (jnp.sum(acc[0] * acc[0], axis=0, keepdims=True)
              + jnp.sum(acc[1] * acc[1], axis=0, keepdims=True))
        sum_ref[...] = sum_ref[...] + s[:, None, :]
        ssq_ref[...] = ssq_ref[...] + ss[:, None, :]


def _affine_kernel(y_ref, scale_ref, shift_ref, o_ref):
    """BatchNorm pass 2: per-channel y*scale + shift, HBM-bound row tiles."""
    y = y_ref[...].astype(jnp.float32)
    o_ref[...] = (y * scale_ref[...] + shift_ref[...]).astype(o_ref.dtype)


# ----------------------------------------------------------------------------
# Wrapper
# ----------------------------------------------------------------------------
def encoder_block_forward(x_nchw, conv_w, conv_b, bn_gamma, bn_beta,
                          position: Position):
    """Pallas implementation of EncoderBlock.forward.

    x_nchw : (N, Cin, H, W) f32, conv_w : (Cout, Cin, 4, 4) OIHW, conv_b : (Cout,)
    returns (N, Cout, H//2, W//2) f32
    """
    N, Cin, H, W = x_nchw.shape
    Cout = conv_w.shape[0]
    # TODO(synk): odd W//2 (W % 4 != 0) would need an extra padded output column
    #             masked out of the BatchNorm statistics; not implemented.
    assert H % 2 == 0 and W % 4 == 0, "EncoderBlock kernel requires H%2==0 and W%4==0"
    Ho, Wo = H // 2, W // 2
    wo2 = Wo // 2
    HW = Ho * Wo
    Cp = _round_up(Cout, 128)                    # lane-dense padded output channels
    tcp = _pick_co_tile(Cp)                      # Cout tile (caps accumulator width)
    th = _pick_row_tile(Ho, wo2, tcp)            # output rows per grid step
    tm2 = th * wo2

    # ---- layout glue (NCHW API boundary): NHWC, LeakyReLU once (f32), bf16,
    #      pad=1, window-packed parity phases (lane-dense, K=4*Cin ready). -------
    x = jnp.transpose(x_nchw, (0, 2, 3, 1)).astype(jnp.float32)
    if position is not Position.OUTER:
        x = jnp.where(x > 0, x, 0.2 * x)
    xp = jnp.pad(x.astype(jnp.bfloat16), ((0, 0), (1, 1), (1, 1), (0, 0)))
    phases = []
    for p in (0, 1):                                           # input row parity
        rows_p = xp[:, p::2][:, :Ho + 1]                       # (N, Ho+1, W+2, Cin)
        for q in (0, 1):                                       # output column parity
            win = rows_p[:, :, 2 * q:2 * q + 4 * wo2, :]       # (N, Ho+1, 2*Wo, Cin)
            phases.append(win.reshape(N, Ho + 1, wo2, 4 * Cin))

    # weights OIHW -> (kh, kw*Cin+ci, Cp) bf16 (zero-padded co), bias (1, Cp) f32
    w_mat = jnp.transpose(conv_w, (2, 3, 1, 0)).reshape(4, 4 * Cin, Cout)
    w_mat = jnp.pad(w_mat, ((0, 0), (0, 0), (0, Cp - Cout))).astype(jnp.bfloat16)
    b_mat = jnp.pad(conv_b, (0, Cp - Cout)).reshape(1, Cp).astype(jnp.float32)

    with_stats = position is Position.MIDDLE
    y_dtype = jnp.bfloat16 if with_stats else jnp.float32      # bf16 only for the
                                                               # re-read intermediate
    grid = (N, Cp // tcp, Ho // th)
    x_spec = pl.BlockSpec((pl.Squeezed(), Ho + 1, wo2, 4 * Cin),
                          lambda n, co, t: (n, 0, 0, 0))       # resident per batch elem
    w_spec = pl.BlockSpec((4, 4 * Cin, tcp), lambda n, co, t: (0, 0, co))
    b_spec = pl.BlockSpec((1, tcp), lambda n, co, t: (0, co))
    y_spec = pl.BlockSpec((pl.Squeezed(), 2, tm2, tcp), lambda n, co, t: (n, 0, t, co))
    y_shape = jax.ShapeDtypeStruct((N, 2, Ho * wo2, Cp), y_dtype)

    if with_stats:
        # per-batch stats so the batch/channel axes stay "parallel" (v7x megacore)
        stat_spec = pl.BlockSpec((1, 8, tcp), lambda n, co, t: (n, 0, co))
        out_shape = (y_shape,
                     jax.ShapeDtypeStruct((N, 8, Cp), jnp.float32),
                     jax.ShapeDtypeStruct((N, 8, Cp), jnp.float32))
        out_specs = (y_spec, stat_spec, stat_spec)
        dims = ("parallel", "parallel", "arbitrary")           # accumulate over row tiles
    else:
        out_shape = y_shape
        out_specs = y_spec
        dims = ("parallel", "parallel", "parallel")

    cost = pl.CostEstimate(
        flops=2 * N * HW * 16 * Cin * Cp,
        transcendentals=0,
        bytes_accessed=(4 * N * (Ho + 1) * wo2 * 4 * Cin * 2   # bf16 phases
                        + 4 * 4 * Cin * Cp * 2                 # bf16 weights
                        + N * 2 * Ho * wo2 * Cp * jnp.dtype(y_dtype).itemsize))

    kern = functools.partial(_conv_kernel, th=th, wo2=wo2, cin=Cin,
                             with_stats=with_stats)
    res = pl.pallas_call(
        kern,
        out_shape=out_shape,
        grid_spec=pltpu.PrefetchScalarGridSpec(
            num_scalar_prefetch=0,
            grid=grid,
            in_specs=[x_spec, x_spec, x_spec, x_spec, w_spec, b_spec],
            out_specs=out_specs),
        compiler_params=pltpu.CompilerParams(
            dimension_semantics=dims, vmem_limit_bytes=_VMEM_LIMIT),
        cost_estimate=cost,
    )(*phases, w_mat, b_mat)

    if with_stats:
        y, s_all, ss_all = res
        cnt = float(N * HW)
        s = jnp.sum(s_all[:, 0, :], axis=0)                    # (Cp,)
        ss = jnp.sum(ss_all[:, 0, :], axis=0)
        mean = s / cnt
        var = jnp.maximum(ss / cnt - mean * mean, 0.0)         # guard cancellation
        inv = jax.lax.rsqrt(var + 1e-5)
        gamma_p = jnp.pad(bn_gamma.astype(jnp.float32), (0, Cp - Cout))
        beta_p = jnp.pad(bn_beta.astype(jnp.float32), (0, Cp - Cout))
        scale = (gamma_p * inv).reshape(1, Cp)
        shift = (beta_p - mean * gamma_p * inv).reshape(1, Cp)

        # BatchNorm pass 2: HBM-bound affine over the flattened tensor.
        y2 = y.reshape(N * HW, Cp)
        rb = _pick_affine_rows(N * HW)
        row_spec = pl.BlockSpec((rb, Cp), lambda i: (i, 0))
        vec_spec = pl.BlockSpec((1, Cp), lambda i: (0, 0))
        y = pl.pallas_call(
            _affine_kernel,
            out_shape=jax.ShapeDtypeStruct((N * HW, Cp), jnp.float32),
            grid_spec=pltpu.PrefetchScalarGridSpec(
                num_scalar_prefetch=0,
                grid=(N * HW // rb,),
                in_specs=[row_spec, vec_spec, vec_spec],
                out_specs=row_spec),
            compiler_params=pltpu.CompilerParams(
                dimension_semantics=("parallel",),
                vmem_limit_bytes=_VMEM_LIMIT),
        )(y2, scale, shift)
        y = y.reshape(N, 2, Ho, wo2, Cp)
    else:
        y = res.reshape(N, 2, Ho, wo2, Cp)

    # (N,2,Ho,Wo/2,Cp) -> NCHW: interleave column parities, drop channel padding.
    y = jnp.transpose(y, (0, 4, 2, 3, 1)).reshape(N, Cp, Ho, Wo)
    return y[:, :Cout]


# ----------------------------------------------------------------------------
# Pure-JAX f32 reference (silent correctness check)
# ----------------------------------------------------------------------------
def _reference(x_nchw, conv_w, conv_b, gamma, beta, position: Position):
    y = x_nchw
    if position is not Position.OUTER:
        y = jnp.where(y > 0, y, 0.2 * y)
    y = jax.lax.conv_general_dilated(
        y, conv_w, window_strides=(2, 2), padding=((1, 1), (1, 1)),
        dimension_numbers=("NCHW", "OIHW", "NCHW"))
    y = y + conv_b[None, :, None, None]
    if position is Position.MIDDLE:
        mean = jnp.mean(y, axis=(0, 2, 3), keepdims=True)
        var = jnp.mean((y - mean) ** 2, axis=(0, 2, 3), keepdims=True)
        y = ((y - mean) * jax.lax.rsqrt(var + 1e-5)
             * gamma[None, :, None, None] + beta[None, :, None, None])
    return y


# ----------------------------------------------------------------------------
if __name__ == "__main__":
    key = jax.random.PRNGKey(0)
    k_x, k_w, k_b = jax.random.split(key, 3)

    N, Cin, H, W = 2, 4, 16, 16
    Cout = 8

    x = jax.random.normal(k_x, (N, Cin, H, W), dtype=jnp.float32)
    conv_w = jax.random.normal(k_w, (Cout, Cin, 4, 4), dtype=jnp.float32) * 0.1
    conv_b = jax.random.normal(k_b, (Cout,), dtype=jnp.float32) * 0.1
    bn_gamma = jnp.ones((Cout,), dtype=jnp.float32)   # PyTorch BatchNorm2d default init
    bn_beta = jnp.zeros((Cout,), dtype=jnp.float32)

    ok = True
    for position in (Position.OUTER, Position.INNER, Position.MIDDLE):
        out = jax.block_until_ready(
            encoder_block_forward(x, conv_w, conv_b, bn_gamma, bn_beta, position))
        ref = _reference(x, conv_w, conv_b, bn_gamma, bn_beta, position)
        assert out.shape == (N, Cout, H // 2, W // 2)
        # bf16 MXU operands / bf16 intermediate -> loosened tolerance vs f32 reference
        ok = ok and bool(jnp.allclose(out, ref, atol=5e-2, rtol=5e-2))

    if ok:
        print("KERNEL_OK")
</pallas_src>

<mosaic_0001>
module attributes {stable_mosaic.version = 11 : i64} {
  func.func @_conv_kernel(%arg0: i32, %arg1: i32, %arg2: i32, %arg3: memref<1x9x4x16xbf16, #tpu.memory_space<vmem>>, %arg4: memref<1x9x4x16xbf16, #tpu.memory_space<vmem>>, %arg5: memref<1x9x4x16xbf16, #tpu.memory_space<vmem>>, %arg6: memref<1x9x4x16xbf16, #tpu.memory_space<vmem>>, %arg7: memref<4x16x128xbf16, #tpu.memory_space<vmem>>, %arg8: memref<1x128xf32, #tpu.memory_space<vmem>>, %arg9: memref<1x2x32x128xf32, #tpu.memory_space<vmem>>) attributes {dimension_semantics = [#tpu.dimension_semantics<parallel>, #tpu.dimension_semantics<parallel>, #tpu.dimension_semantics<parallel>], iteration_bounds = array<i64: 2, 1, 1>, scalar_prefetch = 0 : i64, scratch_operands = 0 : i64, tpu.core_type = #tpu.core_type<tc>, window_params = [{transform_indices = @transform_0, window_bounds = array<i64: 1, 9, 4, 16>}, {transform_indices = @transform_1, window_bounds = array<i64: 1, 9, 4, 16>}, {transform_indices = @transform_2, window_bounds = array<i64: 1, 9, 4, 16>}, {transform_indices = @transform_3, window_bounds = array<i64: 1, 9, 4, 16>}, {transform_indices = @transform_4, window_bounds = array<i64: 4, 16, 128>}, {transform_indices = @transform_5, window_bounds = array<i64: 1, 128>}, {transform_indices = @transform_6, window_bounds = array<i64: 1, 2, 32, 128>}]} {
    %c8_i32 = arith.constant 8 : i32
    %0 = arith.muli %arg2, %c8_i32 : i32
    %c0 = arith.constant 0 : index
    %c0_0 = arith.constant 0 : index
    %1 = vector.load %arg8[%c0, %c0_0] : memref<1x128xf32, #tpu.memory_space<vmem>>, vector<1x128xf32>
    %2 = vector.shape_cast %1 : vector<1x128xf32> to vector<1x128xf32>
    %3 = vector.broadcast %2 : vector<1x128xf32> to vector<32x128xf32>
    %4 = vector.shape_cast %1 : vector<1x128xf32> to vector<1x128xf32>
    %5 = vector.broadcast %4 : vector<1x128xf32> to vector<32x128xf32>
    %c0_1 = arith.constant 0 : index
    %6 = arith.index_cast %0 : i32 to index
    %c0_2 = arith.constant 0 : index
    %c0_3 = arith.constant 0 : index
    %7 = vector.load %arg3[%c0_1, %6, %c0_2, %c0_3] : memref<1x9x4x16xbf16, #tpu.memory_space<vmem>>, vector<1x9x4x16xbf16>
    %8 = vector.shape_cast %7 : vector<1x9x4x16xbf16> to vector<9x4x16xbf16>
    %9 = vector.extract_strided_slice %8 {offsets = [0, 0, 0], sizes = [8, 4, 16], strides = [1, 1, 1]} : vector<9x4x16xbf16> to vector<8x4x16xbf16>
    %10 = vector.shape_cast %9 : vector<8x4x16xbf16> to vector<32x16xbf16>
    %c0_4 = arith.constant 0 : index
    %c0_5 = arith.constant 0 : index
    %c0_6 = arith.constant 0 : index
    %11 = vector.load %arg7[%c0_4, %c0_5, %c0_6] : memref<4x16x128xbf16, #tpu.memory_space<vmem>>, vector<1x16x128xbf16>
    %12 = vector.shape_cast %11 : vector<1x16x128xbf16> to vector<16x128xbf16>
    %cst = arith.constant dense<0.000000e+00> : vector<32x128xf32>
    %13 = tpu.matmul %10, %12, %cst {dimension_numbers = #tpu.dot_dimension_numbers<[1], [0], [0], [1], [0, 0, 1, 1], [], []>} : vector<32x16xbf16>, vector<16x128xbf16>, vector<32x128xf32> -> vector<32x128xf32>
    %14 = arith.addf %3, %13 : vector<32x128xf32>
    %15 = vector.extract_strided_slice %8 {offsets = [1, 0, 0], sizes = [8, 4, 16], strides = [1, 1, 1]} : vector<9x4x16xbf16> to vector<8x4x16xbf16>
    %16 = vector.shape_cast %15 : vector<8x4x16xbf16> to vector<32x16xbf16>
    %c2 = arith.constant 2 : index
    %c0_7 = arith.constant 0 : index
    %c0_8 = arith.constant 0 : index
    %17 = vector.load %arg7[%c2, %c0_7, %c0_8] : memref<4x16x128xbf16, #tpu.memory_space<vmem>>, vector<1x16x128xbf16>
    %18 = vector.shape_cast %17 : vector<1x16x128xbf16> to vector<16x128xbf16>
    %cst_9 = arith.constant dense<0.000000e+00> : vector<32x128xf32>
    %19 = tpu.matmul %16, %18, %cst_9 {dimension_numbers = #tpu.dot_dimension_numbers<[1], [0], [0], [1], [0, 0, 1, 1], [], []>} : vector<32x16xbf16>, vector<16x128xbf16>, vector<32x128xf32> -> vector<32x128xf32>
    %20 = arith.addf %14, %19 : vector<32x128xf32>
    %c0_10 = arith.constant 0 : index
    %21 = arith.index_cast %0 : i32 to index
    %c0_11 = arith.constant 0 : index
    %c0_12 = arith.constant 0 : index
    %22 = vector.load %arg4[%c0_10, %21, %c0_11, %c0_12] : memref<1x9x4x16xbf16, #tpu.memory_space<vmem>>, vector<1x9x4x16xbf16>
    %23 = vector.shape_cast %22 : vector<1x9x4x16xbf16> to vector<9x4x16xbf16>
    %24 = vector.extract_strided_slice %23 {offsets = [0, 0, 0], sizes = [8, 4, 16], strides = [1, 1, 1]} : vector<9x4x16xbf16> to vector<8x4x16xbf16>
    %25 = vector.shape_cast %24 : vector<8x4x16xbf16> to vector<32x16xbf16>
    %c0_13 = arith.constant 0 : index
    %c0_14 = arith.constant 0 : index
    %c0_15 = arith.constant 0 : index
    %26 = vector.load %arg7[%c0_13, %c0_14, %c0_15] : memref<4x16x128xbf16, #tpu.memory_space<vmem>>, vector<1x16x128xbf16>
    %27 = vector.shape_cast %26 : vector<1x16x128xbf16> to vector<16x128xbf16>
    %cst_16 = arith.constant dense<0.000000e+00> : vector<32x128xf32>
    %28 = tpu.matmul %25, %27, %cst_16 {dimension_numbers = #tpu.dot_dimension_numbers<[1], [0], [0], [1], [0, 0, 1, 1], [], []>} : vector<32x16xbf16>, vector<16x128xbf16>, vector<32x128xf32> -> vector<32x128xf32>
    %29 = arith.addf %5, %28 : vector<32x128xf32>
    %30 = vector.extract_strided_slice %23 {offsets = [1, 0, 0], sizes = [8, 4, 16], strides = [1, 1, 1]} : vector<9x4x16xbf16> to vector<8x4x16xbf16>
    %31 = vector.shape_cast %30 : vector<8x4x16xbf16> to vector<32x16xbf16>
    %c2_17 = arith.constant 2 : index
    %c0_18 = arith.constant 0 : index
    %c0_19 = arith.constant 0 : index
    %32 = vector.load %arg7[%c2_17, %c0_18, %c0_19] : memref<4x16x128xbf16, #tpu.memory_space<vmem>>, vector<1x16x128xbf16>
    %33 = vector.shape_cast %32 : vector<1x16x128xbf16> to vector<16x128xbf16>
    %cst_20 = arith.constant dense<0.000000e+00> : vector<32x128xf32>
    %34 = tpu.matmul %31, %33, %cst_20 {dimension_numbers = #tpu.dot_dimension_numbers<[1], [0], [0], [1], [0, 0, 1, 1], [], []>} : vector<32x16xbf16>, vector<16x128xbf16>, vector<32x128xf32> -> vector<32x128xf32>
    %35 = arith.addf %29, %34 : vector<32x128xf32>
    %c0_21 = arith.constant 0 : index
    %36 = arith.index_cast %0 : i32 to index
    %c0_22 = arith.constant 0 : index
    %c0_23 = arith.constant 0 : index
    %37 = vector.load %arg5[%c0_21, %36, %c0_22, %c0_23] : memref<1x9x4x16xbf16, #tpu.memory_space<vmem>>, vector<1x9x4x16xbf16>
    %38 = vector.shape_cast %37 : vector<1x9x4x16xbf16> to vector<9x4x16xbf16>
    %39 = vector.extract_strided_slice %38 {offsets = [0, 0, 0], sizes = [8, 4, 16], strides = [1, 1, 1]} : vector<9x4x16xbf16> to vector<8x4x16xbf16>
    %40 = vector.shape_cast %39 : vector<8x4x16xbf16> to vector<32x16xbf16>
    %c1 = arith.constant 1 : index
    %c0_24 = arith.constant 0 : index
    %c0_25 = arith.constant 0 : index
    %41 = vector.load %arg7[%c1, %c0_24, %c0_25] : memref<4x16x128xbf16, #tpu.memory_space<vmem>>, vector<1x16x128xbf16>
    %42 = vector.shape_cast %41 : vector<1x16x128xbf16> to vector<16x128xbf16>
    %cst_26 = arith.constant dense<0.000000e+00> : vector<32x128xf32>
    %43 = tpu.matmul %40, %42, %cst_26 {dimension_numbers = #tpu.dot_dimension_numbers<[1], [0], [0], [1], [0, 0, 1, 1], [], []>} : vector<32x16xbf16>, vector<16x128xbf16>, vector<32x128xf32> -> vector<32x128xf32>
    %44 = arith.addf %20, %43 : vector<32x128xf32>
    %45 = vector.extract_strided_slice %38 {offsets = [1, 0, 0], sizes = [8, 4, 16], strides = [1, 1, 1]} : vector<9x4x16xbf16> to vector<8x4x16xbf16>
    %46 = vector.shape_cast %45 : vector<8x4x16xbf16> to vector<32x16xbf16>
    %c3 = arith.constant 3 : index
    %c0_27 = arith.constant 0 : index
    %c0_28 = arith.constant 0 : index
    %47 = vector.load %arg7[%c3, %c0_27, %c0_28] : memref<4x16x128xbf16, #tpu.memory_space<vmem>>, vector<1x16x128xbf16>
    %48 = vector.shape_cast %47 : vector<1x16x128xbf16> to vector<16x128xbf16>
    %cst_29 = arith.constant dense<0.000000e+00> : vector<32x128xf32>
    %49 = tpu.matmul %46, %48, %cst_29 {dimension_numbers = #tpu.dot_dimension_numbers<[1], [0], [0], [1], [0, 0, 1, 1], [], []>} : vector<32x16xbf16>, vector<16x128xbf16>, vector<32x128xf32> -> vector<32x128xf32>
    %50 = arith.addf %44, %49 : vector<32x128xf32>
    %c0_30 = arith.constant 0 : index
    %51 = arith.index_cast %0 : i32 to index
    %c0_31 = arith.constant 0 : index
    %c0_32 = arith.constant 0 : index
    %52 = vector.load %arg6[%c0_30, %51, %c0_31, %c0_32] : memref<1x9x4x16xbf16, #tpu.memory_space<vmem>>, vector<1x9x4x16xbf16>
    %53 = vector.shape_cast %52 : vector<1x9x4x16xbf16> to vector<9x4x16xbf16>
    %54 = vector.extract_strided_slice %53 {offsets = [0, 0, 0], sizes = [8, 4, 16], strides = [1, 1, 1]} : vector<9x4x16xbf16> to vector<8x4x16xbf16>
    %55 = vector.shape_cast %54 : vector<8x4x16xbf16> to vector<32x16xbf16>
    %c1_33 = arith.constant 1 : index
    %c0_34 = arith.constant 0 : index
    %c0_35 = arith.constant 0 : index
    %56 = vector.load %arg7[%c1_33, %c0_34, %c0_35] : memref<4x16x128xbf16, #tpu.memory_space<vmem>>, vector<1x16x128xbf16>
    %57 = vector.shape_cast %56 : vector<1x16x128xbf16> to vector<16x128xbf16>
    %cst_36 = arith.constant dense<0.000000e+00> : vector<32x128xf32>
    %58 = tpu.matmul %55, %57, %cst_36 {dimension_numbers = #tpu.dot_dimension_numbers<[1], [0], [0], [1], [0, 0, 1, 1], [], []>} : vector<32x16xbf16>, vector<16x128xbf16>, vector<32x128xf32> -> vector<32x128xf32>
    %59 = arith.addf %35, %58 : vector<32x128xf32>
    %60 = vector.extract_strided_slice %53 {offsets = [1, 0, 0], sizes = [8, 4, 16], strides = [1, 1, 1]} : vector<9x4x16xbf16> to vector<8x4x16xbf16>
    %61 = vector.shape_cast %60 : vector<8x4x16xbf16> to vector<32x16xbf16>
    %c3_37 = arith.constant 3 : index
    %c0_38 = arith.constant 0 : index
    %c0_39 = arith.constant 0 : index
    %62 = vector.load %arg7[%c3_37, %c0_38, %c0_39] : memref<4x16x128xbf16, #tpu.memory_space<vmem>>, vector<1x16x128xbf16>
    %63 = vector.shape_cast %62 : vector<1x16x128xbf16> to vector<16x128xbf16>
    %cst_40 = arith.constant dense<0.000000e+00> : vector<32x128xf32>
    %64 = tpu.matmul %61, %63, %cst_40 {dimension_numbers = #tpu.dot_dimension_numbers<[1], [0], [0], [1], [0, 0, 1, 1], [], []>} : vector<32x16xbf16>, vector<16x128xbf16>, vector<32x128xf32> -> vector<32x128xf32>
    %65 = arith.addf %59, %64 : vector<32x128xf32>
    %c0_41 = arith.constant 0 : index
    %c0_42 = arith.constant 0 : index
    %c0_43 = arith.constant 0 : index
    %c0_44 = arith.constant 0 : index
    %66 = vector.load %arg9[%c0_41, %c0_42, %c0_43, %c0_44] : memref<1x2x32x128xf32, #tpu.memory_space<vmem>>, vector<1x1x32x128xf32>
    %67 = vector.shape_cast %66 : vector<1x1x32x128xf32> to vector<32x128xf32>
    %68 = vector.shape_cast %50 : vector<32x128xf32> to vector<1x1x32x128xf32>
    tpu.vector_store %arg9[%c0_41, %c0_42, %c0_43, %c0_44], %68 {strides = array<i32>} : memref<1x2x32x128xf32, #tpu.memory_space<vmem>>, vector<1x1x32x128xf32>,
    %c0_45 = arith.constant 0 : index
    %c1_46 = arith.constant 1 : index
    %c0_47 = arith.constant 0 : index
    %c0_48 = arith.constant 0 : index
    %69 = vector.load %arg9[%c0_45, %c1_46, %c0_47, %c0_48] : memref<1x2x32x128xf32, #tpu.memory_space<vmem>>, vector<1x1x32x128xf32>
    %70 = vector.shape_cast %69 : vector<1x1x32x128xf32> to vector<32x128xf32>
    %71 = vector.shape_cast %65 : vector<32x128xf32> to vector<1x1x32x128xf32>
    tpu.vector_store %arg9[%c0_45, %c1_46, %c0_47, %c0_48], %71 {strides = array<i32>} : memref<1x2x32x128xf32, #tpu.memory_space<vmem>>, vector<1x1x32x128xf32>,
    return
  }
  func.func @transform_0(%arg0: i32, %arg1: i32, %arg2: i32) -> (i32, i32, i32, i32) {
    %c0_i32 = arith.constant 0 : i32
    %c0_i32_0 = arith.constant 0 : i32
    %c0_i32_1 = arith.constant 0 : i32
    %c0_i32_2 = arith.constant 0 : i32
    return %arg0, %c0_i32, %c0_i32_0, %c0_i32_1 : i32, i32, i32, i32
  }
  func.func @transform_1(%arg0: i32, %arg1: i32, %arg2: i32) -> (i32, i32, i32, i32) {
    %c0_i32 = arith.constant 0 : i32
    %c0_i32_0 = arith.constant 0 : i32
    %c0_i32_1 = arith.constant 0 : i32
    %c0_i32_2 = arith.constant 0 : i32
    return %arg0, %c0_i32, %c0_i32_0, %c0_i32_1 : i32, i32, i32, i32
  }
  func.func @transform_2(%arg0: i32, %arg1: i32, %arg2: i32) -> (i32, i32, i32, i32) {
    %c0_i32 = arith.constant 0 : i32
    %c0_i32_0 = arith.constant 0 : i32
    %c0_i32_1 = arith.constant 0 : i32
    %c0_i32_2 = arith.constant 0 : i32
    return %arg0, %c0_i32, %c0_i32_0, %c0_i32_1 : i32, i32, i32, i32
  }
  func.func @transform_3(%arg0: i32, %arg1: i32, %arg2: i32) -> (i32, i32, i32, i32) {
    %c0_i32 = arith.constant 0 : i32
    %c0_i32_0 = arith.constant 0 : i32
    %c0_i32_1 = arith.constant 0 : i32
    %c0_i32_2 = arith.constant 0 : i32
    return %arg0, %c0_i32, %c0_i32_0, %c0_i32_1 : i32, i32, i32, i32
  }
  func.func @transform_4(%arg0: i32, %arg1: i32, %arg2: i32) -> (i32, i32, i32) {
    %c0_i32 = arith.constant 0 : i32
    %c0_i32_0 = arith.constant 0 : i32
    %c0_i32_1 = arith.constant 0 : i32
    return %c0_i32, %c0_i32_0, %arg1 : i32, i32, i32
  }
  func.func @transform_5(%arg0: i32, %arg1: i32, %arg2: i32) -> (i32, i32) {
    %c0_i32 = arith.constant 0 : i32
    %c0_i32_0 = arith.constant 0 : i32
    return %c0_i32, %arg1 : i32, i32
  }
  func.func @transform_6(%arg0: i32, %arg1: i32, %arg2: i32) -> (i32, i32, i32, i32) {
    %c0_i32 = arith.constant 0 : i32
    %c0_i32_0 = arith.constant 0 : i32
    return %arg0, %c0_i32, %arg2, %arg1 : i32, i32, i32, i32
  }
}

</mosaic_0001>

<llo_original>
// kernel: tpu_custom_call.1
$region0: #{tpu_custom_call.1}
  #allocation0 [shape = 'u32[]', space=smem, size = 0x4, offset = 0x4, fixed_abs, tag = 'smem constant byte address 0x4 - core index']
  #allocation1 [shape = 'u32[144,128]{1,0:T(1,128)}', space=vmem, size = 0x12000, scoped, tag = 'internal scratch']
  %s0 = inlined_call_operand.hbm [shape: bf16[2,9,4,16], index: 0, kind: input, shape index: {}]
  %s1 = inlined_call_operand.hbm [shape: bf16[2,9,4,16], index: 1, kind: input, shape index: {}]
  %s2 = inlined_call_operand.hbm [shape: bf16[2,9,4,16], index: 2, kind: input, shape index: {}]
  %s3 = inlined_call_operand.hbm [shape: bf16[2,9,4,16], index: 3, kind: input, shape index: {}]
  %s4 = inlined_call_operand.hbm [shape: bf16[4,16,128], index: 4, kind: input, shape index: {}]
  %s5 = inlined_call_operand.hbm [shape: f32[1,128], index: 5, kind: input, shape index: {}]
  %s6 = inlined_call_operand.hbm [shape: f32[2,2,32,128], index: 6, kind: output, shape index: {}]
  %s7 = sld [smem:[#allocation0]]
  $region81: #{tpu_custom_call.1} parent=0
    _
  %s9 = ssub.s32 1, %s7
  %s10 = scalar_select 0, %s9, %s7
  $region1: #{tpu_custom_call.1} parent=0
    #allocation2 [shape = 'u8[18432]{0}', space=vmem, size = 0x4800, scoped, tag = 'input window, operand 0']
    #allocation3 [shape = 's32[2]{0}', space=sflag, size = 0x8, scoped, tag = 'scoped memory for tpu_custom_call.1']
    #allocation4 [shape = 's32[2]{0}', space=sflag, size = 0x8, scoped, tag = 'scoped memory for tpu_custom_call.1']
    #allocation5 [shape = 'u8[18432]{0}', space=vmem, size = 0x4800, scoped, tag = 'input window, operand 1']
    #allocation6 [shape = 's32[2]{0}', space=sflag, size = 0x8, scoped, tag = 'scoped memory for tpu_custom_call.1']
    #allocation7 [shape = 'u8[18432]{0}', space=vmem, size = 0x4800, scoped, tag = 'input window, operand 2']
    #allocation8 [shape = 'u8[18432]{0}', space=vmem, size = 0x4800, scoped, tag = 'input window, operand 3']
    #allocation9 [shape = 's32[2]{0}', space=sflag, size = 0x8, scoped, tag = 'scoped memory for tpu_custom_call.1']
    #allocation10 [shape = 'u8[16384]{0}', space=vmem, size = 0x4000, scoped, tag = 'input window, operand 4, single buffered']
    #allocation11 [shape = 'u8[512]{0}', space=vmem, size = 0x400, scoped, tag = 'input window, operand 5, single buffered']
    #allocation12 [shape = 's32[1]{0}', space=sflag, size = 0x4, scoped, tag = 'scoped memory for tpu_custom_call.1']
    #allocation13 [shape = 'u8[65536]{0}', space=vmem, size = 0x10000, scoped, tag = 'output window, operand 0']
    %11 = vsyncpa [#allocation3], 0
    %s12 = scalar_lea.sflag [#allocation3], 1
    %13 = vsyncpa %s12, 0
    %14 = vsyncpa [#allocation6], 0
    %s15 = scalar_lea.sflag [#allocation6], 1
    %16 = vsyncpa %s15, 0
    %17 = vsyncpa [#allocation9], 0
    %s18 = scalar_lea.sflag [#allocation9], 1
    %19 = vsyncpa %s18, 0
    %20 = vsyncpa [#allocation12], 0
    %21 = vsyncpa [#allocation4], 0
    %s22 = scalar_lea.sflag [#allocation4], 1
    %23 = vsyncpa %s22, 0
    loop: start=0, step=1, limit=4
    $region2: #{tpu_custom_call.1} parent=1 // loop_pre_header
      _
    $region3: #{tpu_custom_call.1} parent=1 // loop_header
      %s25 = sphi 0, %s29
      %p26 = scmp.ge.s32.totalorder %s25, 4
      %s32 = sphi 0, %s51
      %s33 = sphi 0, %s47
      %s34 = sphi 0, %s43
      %s35 = sphi 0, %s32
      %s36 = sphi 0, %s33
      %s37 = sphi 0, %s34
      %s38 = sphi 0, %s35
      %s39 = sphi 0, %s36
      %s40 = sphi 0, %s37
      %s54 = sphi 0, %s56
      %s57 = sphi 0, %s54
      %s58 = sphi 0, %s57
      %s74 = sphi 0, %s58
      %s80 = sphi 0, %s82
      %s83 = sphi 0, %s80
      %s84 = sphi 0, %s83
      %s100 = sphi 0, %s84
      %s106 = sphi 0, %s108
      %s109 = sphi 0, %s106
      %s110 = sphi 0, %s109
      %s126 = sphi 0, %s110
      %s132 = sphi 0, %s134
      %s135 = sphi 0, %s132
      %s136 = sphi 0, %s135
      %s152 = sphi 0, %s136
      %s158 = sphi 0, %s160
      %s161 = sphi 0, %s158
      %s162 = sphi 0, %s161
      %s178 = sphi 0, %s162
      %s184 = sphi 0, %s186
      %s187 = sphi 0, %s184
      %s188 = sphi 0, %s187
      %s204 = sphi 0, %s188
      %s214 = sphi 0, %s216
      %s217 = sphi 0, %s214
      %s218 = sphi 0, %s217
      %s234 = sphi 0, %s218
    $region4: #{tpu_custom_call.1} parent=1 // loop_header_branch
      %28 = sbr.rel (%p26) target = $region8
    $region5: #{tpu_custom_call.1} parent=1 // loop_body
      %s30 = ssub.s32 %s25, 1
      %s31 = ssub.s32 %s25, 2
      %s41 = sadd.s32 1, %s34
      %p42 = scmp.ge.s32.totalorder %s41, 1
      %s43 = scalar_select %p42, 0, %s41
      %s44 = sadd.s32 1, %s33
      %s45 = scalar_select %p42, %s44, %s33
      %p46 = scmp.ge.s32.totalorder %s45, 1
      %s47 = scalar_select %p46, 0, %s45
      %s48 = sadd.s32 1, %s32
      %s49 = scalar_select %p46, %s48, %s32
      %p50 = scmp.ge.s32.totalorder %s49, 2
      %s51 = scalar_select %p50, 0, %s49
      %s52 = ssub.s32 %s32, %s51
      %p53 = scmp.eq.s32.totalorder %s52, 0
      %s55 = sadd.s32 %s54, 1
      %s56 = scalar_select %p53, %s54, %s55
      %p59 = pneg %p53
      %p60 = scmp.eq.s32.totalorder %s25, 1
      %p61 = por %p59, %p60
      %p62 = scmp.ne.s32.totalorder %s54, %s57
      %p63 = scmp.eq.s32.totalorder %s25, 0
      %p64 = por %p62, %p63
      %p65 = scmp.ne.s32.totalorder %s54, %s57
      %p66 = scmp.eq.s32.totalorder %s30, 1
      %p67 = por %p65, %p66
      %p68 = scmp.ne.s32.totalorder %s57, %s58
      %p69 = scmp.eq.s32.totalorder %s30, 0
      %p70 = por %p68, %p69
      %p71 = scmp.ne.s32.totalorder %s57, %s58
      %p72 = scmp.eq.s32.totalorder %s31, 1
      %p73 = por %p71, %p72
      %p75 = scmp.ne.s32.totalorder %s58, %s74
      %p76 = scmp.eq.s32.totalorder %s31, 0
      %p77 = por %p75, %p76
      %s78 = ssub.s32 %s32, %s51
      %p79 = scmp.eq.s32.totalorder %s78, 0
      %s81 = sadd.s32 %s80, 1
      %s82 = scalar_select %p79, %s80, %s81
      %p85 = pneg %p79
      %p86 = scmp.eq.s32.totalorder %s25, 1
      %p87 = por %p85, %p86
      %p88 = scmp.ne.s32.totalorder %s80, %s83
      %p89 = scmp.eq.s32.totalorder %s25, 0
      %p90 = por %p88, %p89
      %p91 = scmp.ne.s32.totalorder %s80, %s83
      %p92 = scmp.eq.s32.totalorder %s30, 1
      %p93 = por %p91, %p92
      %p94 = scmp.ne.s32.totalorder %s83, %s84
      %p95 = scmp.eq.s32.totalorder %s30, 0
      %p96 = por %p94, %p95
      %p97 = scmp.ne.s32.totalorder %s83, %s84
      %p98 = scmp.eq.s32.totalorder %s31, 1
      %p99 = por %p97, %p98
      %p101 = scmp.ne.s32.totalorder %s84, %s100
      %p102 = scmp.eq.s32.totalorder %s31, 0
      %p103 = por %p101, %p102
      %s104 = ssub.s32 %s32, %s51
      %p105 = scmp.eq.s32.totalorder %s104, 0
      %s107 = sadd.s32 %s106, 1
      %s108 = scalar_select %p105, %s106, %s107
      %p111 = pneg %p105
      %p112 = scmp.eq.s32.totalorder %s25, 1
      %p113 = por %p111, %p112
      %p114 = scmp.ne.s32.totalorder %s106, %s109
      %p115 = scmp.eq.s32.totalorder %s25, 0
      %p116 = por %p114, %p115
      %p117 = scmp.ne.s32.totalorder %s106, %s109
      %p118 = scmp.eq.s32.totalorder %s30, 1
      %p119 = por %p117, %p118
      %p120 = scmp.ne.s32.totalorder %s109, %s110
      %p121 = scmp.eq.s32.totalorder %s30, 0
      %p122 = por %p120, %p121
      %p123 = scmp.ne.s32.totalorder %s109, %s110
      %p124 = scmp.eq.s32.totalorder %s31, 1
      %p125 = por %p123, %p124
      %p127 = scmp.ne.s32.totalorder %s110, %s126
      %p128 = scmp.eq.s32.totalorder %s31, 0
      %p129 = por %p127, %p128
      %s130 = ssub.s32 %s32, %s51
      %p131 = scmp.eq.s32.totalorder %s130, 0
      %s133 = sadd.s32 %s132, 1
      %s134 = scalar_select %p131, %s132, %s133
      %p137 = pneg %p131
      %p138 = scmp.eq.s32.totalorder %s25, 1
      %p139 = por %p137, %p138
      %p140 = scmp.ne.s32.totalorder %s132, %s135
      %p141 = scmp.eq.s32.totalorder %s25, 0
      %p142 = por %p140, %p141
      %p143 = scmp.ne.s32.totalorder %s132, %s135
      %p144 = scmp.eq.s32.totalorder %s30, 1
      %p145 = por %p143, %p144
      %p146 = scmp.ne.s32.totalorder %s135, %s136
      %p147 = scmp.eq.s32.totalorder %s30, 0
      %p148 = por %p146, %p147
      %p149 = scmp.ne.s32.totalorder %s135, %s136
      %p150 = scmp.eq.s32.totalorder %s31, 1
      %p151 = por %p149, %p150
      %p153 = scmp.ne.s32.totalorder %s136, %s152
      %p154 = scmp.eq.s32.totalorder %s31, 0
      %p155 = por %p153, %p154
      %s156 = ssub.s32 %s33, %s47
      %p157 = scmp.eq.s32.totalorder %s156, 0
      %s159 = sadd.s32 %s158, 1
      %s160 = scalar_select %p157, %s158, %s159
      %p163 = pneg %p157
      %p164 = scmp.eq.s32.totalorder %s25, 1
      %p165 = por %p163, %p164
      %p166 = scmp.ne.s32.totalorder %s158, %s161
      %p167 = scmp.eq.s32.totalorder %s25, 0
      %p168 = por %p166, %p167
      %p169 = scmp.ne.s32.totalorder %s158, %s161
      %p170 = scmp.eq.s32.totalorder %s30, 1
      %p171 = por %p169, %p170
      %p172 = scmp.ne.s32.totalorder %s161, %s162
      %p173 = scmp.eq.s32.totalorder %s30, 0
      %p174 = por %p172, %p173
      %p175 = scmp.ne.s32.totalorder %s161, %s162
      %p176 = scmp.eq.s32.totalorder %s31, 1
      %p177 = por %p175, %p176
      %p179 = scmp.ne.s32.totalorder %s162, %s178
      %p180 = scmp.eq.s32.totalorder %s31, 0
      %p181 = por %p179, %p180
      %s182 = ssub.s32 %s33, %s47
      %p183 = scmp.eq.s32.totalorder %s182, 0
      %s185 = sadd.s32 %s184, 1
      %s186 = scalar_select %p183, %s184, %s185
      %p189 = pneg %p183
      %p190 = scmp.eq.s32.totalorder %s25, 1
      %p191 = por %p189, %p190
      %p192 = scmp.ne.s32.totalorder %s184, %s187
      %p193 = scmp.eq.s32.totalorder %s25, 0
      %p194 = por %p192, %p193
      %p195 = scmp.ne.s32.totalorder %s184, %s187
      %p196 = scmp.eq.s32.totalorder %s30, 1
      %p197 = por %p195, %p196
      %p198 = scmp.ne.s32.totalorder %s187, %s188
      %p199 = scmp.eq.s32.totalorder %s30, 0
      %p200 = por %p198, %p199
      %p201 = scmp.ne.s32.totalorder %s187, %s188
      %p202 = scmp.eq.s32.totalorder %s31, 1
      %p203 = por %p201, %p202
      %p205 = scmp.ne.s32.totalorder %s188, %s204
      %p206 = scmp.eq.s32.totalorder %s31, 0
      %p207 = por %p205, %p206
      %s208 = ssub.s32 %s32, %s51
      %s209 = ssub.s32 %s34, %s43
      %s210 = sor.u32 %s208, %s209
      %s211 = ssub.s32 %s33, %s47
      %s212 = sor.u32 %s210, %s211
      %p213 = scmp.eq.s32.totalorder %s212, 0
      %s215 = sadd.s32 %s214, 1
      %s216 = scalar_select %p213, %s214, %s215
      %p219 = pneg %p213
      %p220 = scmp.eq.s32.totalorder %s25, 1
      %p221 = por %p219, %p220
      %p222 = scmp.ne.s32.totalorder %s214, %s217
      %p223 = scmp.eq.s32.totalorder %s25, 0
      %p224 = por %p222, %p223
      %p225 = scmp.ne.s32.totalorder %s214, %s217
      %p226 = scmp.eq.s32.totalorder %s30, 1
      %p227 = por %p225, %p226
      %p228 = scmp.ne.s32.totalorder %s217, %s218
      %p229 = scmp.eq.s32.totalorder %s30, 0
      %p230 = por %p228, %p229
      %p231 = scmp.ne.s32.totalorder %s217, %s218
      %p232 = scmp.eq.s32.totalorder %s31, 1
      %p233 = por %p231, %p232
      %p235 = scmp.ne.s32.totalorder %s218, %s234
      %p236 = scmp.eq.s32.totalorder %s31, 0
      %p237 = por %p235, %p236
      %p238 = scmp.le.s32.totalorder 1, %s25
      %p239 = scmp.lt.s32.totalorder %s25, 3
      %p240 = pnand %p238, %p239
      %p241 = pneg %p240
      // Predicated region
      $region9: #{tpu_custom_call.1} parent=5 // pred_check
        _
      $region10: #{tpu_custom_call.1} parent=5 // pred_check_branch
        %243 = sbr.rel (%p240) target = $region12
      $region11: #{tpu_custom_call.1} parent=5 // pred_region
        %s244 = ssub.s32 %s25, 1
        // Predicated region
        $region13: #{tpu_custom_call.1} parent=11 // pred_check
          %p245 = pneg %p174
        $region14: #{tpu_custom_call.1} parent=11 // pred_check_branch
          %247 = sbr.rel (%p245) target = $region16
        $region15: #{tpu_custom_call.1} parent=11 // pred_region
          %s249 = ssub.s32 512, 512
          %250 = vsyncadd [#allocation9], %s249
          %s251 = smul.addr %s36, 64
          %s252 = scalar_lea.hbm %s4, %s251
          %s253 = sshll.u32 [#allocation10], 4
          %s254 = int_to_ptr.vmem [resolvable:$true] %s253
          %259 = dma.hbm_to_vmem [thread:$0]  %s252, 512, %s254, [#allocation9], 64, 64, 4
        $region16: #{tpu_custom_call.1} parent=11 // pred_fallthru
          _
        // Predicated region
        $region17: #{tpu_custom_call.1} parent=11 // pred_check
          %p260 = pneg %p200
        $region18: #{tpu_custom_call.1} parent=11 // pred_check_branch
          %262 = sbr.rel (%p260) target = $region20
        $region19: #{tpu_custom_call.1} parent=11 // pred_region
          %s264 = ssub.s32 16, 16
          %265 = vsyncadd [#allocation12], %s264
          %s266 = smul.addr %s36, 16
          %s267 = scalar_lea.hbm %s5, %s266
          %s269 = sshll.u32 [#allocation11], 4
          %s270 = int_to_ptr.vmem [resolvable:$true] %s269
          %272 = dma.hbm_to_vmem [thread:$0]  %s267, 16, %s270, [#allocation12]
        $region20: #{tpu_custom_call.1} parent=11 // pred_fallthru
          _
      $region12: #{tpu_custom_call.1} parent=5 // pred_fallthru
        _
      %p273 = scmp.lt.s32.totalorder %s25, 2
      // Predicated region
      $region21: #{tpu_custom_call.1} parent=5 // pred_check
        %p274 = pneg %p273
      $region22: #{tpu_custom_call.1} parent=5 // pred_check_branch
        %276 = sbr.rel (%p274) target = $region24
      $region23: #{tpu_custom_call.1} parent=5 // pred_region
        // Predicated region
        $region25: #{tpu_custom_call.1} parent=23 // pred_check
          %p277 = pneg %p64
        $region26: #{tpu_custom_call.1} parent=23 // pred_check_branch
          %279 = sbr.rel (%p277) target = $region28
        $region27: #{tpu_custom_call.1} parent=23 // pred_region
          %s280 = sand.u32 %s54, 1
          %s281 = scalar_lea.sflag [#allocation3], %s280
          %s282 = sand.u32 %s54, 1
          %s283 = smul.addr %s282, 18
          %s284 = scalar_lea.vmem [#allocation2], %s283
          %s286 = ssub.s32 288, 288
          %287 = vsyncadd %s281, %s286
          %s288 = smul.addr %s32, 9
          %s289 = smul.addr %s288, 32
          %s290 = scalar_lea.hbm %s0, %s289
          %s291 = sshll.u32 %s284, 4
          %s292 = int_to_ptr.vmem [resolvable:$true] %s291
          %297 = dma.hbm_to_vmem [thread:$0]  %s290, 288, %s292, %s281, 32, 32, 2
        $region28: #{tpu_custom_call.1} parent=23 // pred_fallthru
          _
        // Predicated region
        $region29: #{tpu_custom_call.1} parent=23 // pred_check
          %p298 = pneg %p90
        $region30: #{tpu_custom_call.1} parent=23 // pred_check_branch
          %300 = sbr.rel (%p298) target = $region32
        $region31: #{tpu_custom_call.1} parent=23 // pred_region
          %s301 = sand.u32 %s25, 1
          %s302 = scalar_lea.sflag [#allocation6], %s301
          %s303 = sand.u32 %s80, 1
          %s304 = smul.addr %s303, 18
          %s305 = scalar_lea.vmem [#allocation5], %s304
          %s307 = ssub.s32 288, 288
          %308 = vsyncadd %s302, %s307
          %s309 = smul.addr %s32, 9
          %s310 = smul.addr %s309, 32
          %s311 = scalar_lea.hbm %s1, %s310
          %s312 = sshll.u32 %s305, 4
          %s313 = int_to_ptr.vmem [resolvable:$true] %s312
          %318 = dma.hbm_to_vmem [thread:$0]  %s311, 288, %s313, %s302, 32, 32, 2
        $region32: #{tpu_custom_call.1} parent=23 // pred_fallthru
          _
        // Predicated region
        $region33: #{tpu_custom_call.1} parent=23 // pred_check
          %p319 = pneg %p116
        $region34: #{tpu_custom_call.1} parent=23 // pred_check_branch
          %321 = sbr.rel (%p319) target = $region36
        $region35: #{tpu_custom_call.1} parent=23 // pred_region
          %s322 = sand.u32 %s25, 1
          %s323 = scalar_lea.sflag [#allocation6], %s322
          %s324 = sand.u32 %s106, 1
          %s325 = smul.addr %s324, 18
          %s326 = scalar_lea.vmem [#allocation7], %s325
          %s328 = ssub.s32 288, 288
          %329 = vsyncadd %s323, %s328
          %s330 = smul.addr %s32, 9
          %s331 = smul.addr %s330, 32
          %s332 = scalar_lea.hbm %s2, %s331
          %s333 = sshll.u32 %s326, 4
          %s334 = int_to_ptr.vmem [resolvable:$true] %s333
          %339 = dma.hbm_to_vmem [thread:$0]  %s332, 288, %s334, %s323, 32, 32, 2
        $region36: #{tpu_custom_call.1} parent=23 // pred_fallthru
          _
        // Predicated region
        $region37: #{tpu_custom_call.1} parent=23 // pred_check
          %p340 = pneg %p142
        $region38: #{tpu_custom_call.1} parent=23 // pred_check_branch
          %342 = sbr.rel (%p340) target = $region40
        $region39: #{tpu_custom_call.1} parent=23 // pred_region
          %s343 = sand.u32 %s25, 1
          %s344 = scalar_lea.sflag [#allocation9], %s343
          %s345 = sand.u32 %s132, 1
          %s346 = smul.addr %s345, 18
          %s347 = scalar_lea.vmem [#allocation8], %s346
          %s349 = ssub.s32 288, 288
          %350 = vsyncadd %s344, %s349
          %s351 = smul.addr %s32, 9
          %s352 = smul.addr %s351, 32
          %s353 = scalar_lea.hbm %s3, %s352
          %s354 = sshll.u32 %s347, 4
          %s355 = int_to_ptr.vmem [resolvable:$true] %s354
          %360 = dma.hbm_to_vmem [thread:$0]  %s353, 288, %s355, %s344, 32, 32, 2
        $region40: #{tpu_custom_call.1} parent=23 // pred_fallthru
          _
      $region24: #{tpu_custom_call.1} parent=5 // pred_fallthru
        _
      %p361 = scmp.le.s32.totalorder 1, %s25
      %p362 = scmp.lt.s32.totalorder %s25, 3
      %p363 = pnand %p361, %p362
      %p364 = pneg %p363
      // Predicated region
      $region41: #{tpu_custom_call.1} parent=5 // pred_check
        _
      $region42: #{tpu_custom_call.1} parent=5 // pred_check_branch
        %366 = sbr.rel (%p363) target = $region44
      $region43: #{tpu_custom_call.1} parent=5 // pred_region
        %s367 = ssub.s32 %s25, 1
        %s368 = sand.u32 %s57, 1
        %s369 = scalar_lea.sflag [#allocation3], %s368
        %s370 = sand.u32 %s57, 1
        %s371 = smul.addr %s370, 18
        %s372 = scalar_lea.vmem [#allocation2], %s371
        // Predicated region
        $region45: #{tpu_custom_call.1} parent=43 // pred_check
          %p373 = pneg %p70
        $region46: #{tpu_custom_call.1} parent=43 // pred_check_branch
          %375 = sbr.rel (%p373) target = $region48
        $region47: #{tpu_custom_call.1} parent=43 // pred_region
          %376 = dma.done %s369, 288
        $region48: #{tpu_custom_call.1} parent=43 // pred_fallthru
          _
        %s377 = sand.u32 %s30, 1
        %s378 = scalar_lea.sflag [#allocation6], %s377
        %s379 = sand.u32 %s83, 1
        %s380 = smul.addr %s379, 18
        %s381 = scalar_lea.vmem [#allocation5], %s380
        // Predicated region
        $region49: #{tpu_custom_call.1} parent=43 // pred_check
          %p382 = pneg %p96
        $region50: #{tpu_custom_call.1} parent=43 // pred_check_branch
          %384 = sbr.rel (%p382) target = $region52
        $region51: #{tpu_custom_call.1} parent=43 // pred_region
          %385 = dma.done %s378, 288
        $region52: #{tpu_custom_call.1} parent=43 // pred_fallthru
          _
        %s386 = sand.u32 %s30, 1
        %s387 = scalar_lea.sflag [#allocation6], %s386
        %s388 = sand.u32 %s109, 1
        %s389 = smul.addr %s388, 18
        %s390 = scalar_lea.vmem [#allocation7], %s389
        // Predicated region
        $region53: #{tpu_custom_call.1} parent=43 // pred_check
          %p391 = pneg %p122
        $region54: #{tpu_custom_call.1} parent=43 // pred_check_branch
          %393 = sbr.rel (%p391) target = $region56
        $region55: #{tpu_custom_call.1} parent=43 // pred_region
          %394 = dma.done %s387, 288
        $region56: #{tpu_custom_call.1} parent=43 // pred_fallthru
          _
        %s395 = sand.u32 %s30, 1
        %s396 = scalar_lea.sflag [#allocation9], %s395
        %s397 = sand.u32 %s135, 1
        %s398 = smul.addr %s397, 18
        %s399 = scalar_lea.vmem [#allocation8], %s398
        // Predicated region
        $region57: #{tpu_custom_call.1} parent=43 // pred_check
          %p400 = pneg %p148
        $region58: #{tpu_custom_call.1} parent=43 // pred_check_branch
          %402 = sbr.rel (%p400) target = $region60
        $region59: #{tpu_custom_call.1} parent=43 // pred_region
          %403 = dma.done %s396, 288
        $region60: #{tpu_custom_call.1} parent=43 // pred_fallthru
          _
        // Predicated region
        $region61: #{tpu_custom_call.1} parent=43 // pred_check
          %p404 = pneg %p174
        $region62: #{tpu_custom_call.1} parent=43 // pred_check_branch
          %406 = sbr.rel (%p404) target = $region64
        $region63: #{tpu_custom_call.1} parent=43 // pred_region
          %407 = dma.done [#allocation9], 512
        $region64: #{tpu_custom_call.1} parent=43 // pred_fallthru
          _
        // Predicated region
        $region65: #{tpu_custom_call.1} parent=43 // pred_check
          %p408 = pneg %p200
        $region66: #{tpu_custom_call.1} parent=43 // pred_check_branch
          %410 = sbr.rel (%p408) target = $region68
        $region67: #{tpu_custom_call.1} parent=43 // pred_region
          %411 = dma.done [#allocation12], 16
        $region68: #{tpu_custom_call.1} parent=43 // pred_fallthru
          _
        %s412 = sand.u32 %s57, 1
        %s413 = scalar_lea.sflag [#allocation3], %s412
        %s414 = sand.u32 %s57, 1
        %s415 = smul.addr %s414, 18
        %s416 = scalar_lea.vmem [#allocation2], %s415
        %p417 = pneg %p70
        %p418 = pneg %p67
        %s419 = sand.u32 %s30, 1
        %s420 = scalar_lea.sflag [#allocation6], %s419
        %s421 = sand.u32 %s83, 1
        %s422 = smul.addr %s421, 18
        %s423 = scalar_lea.vmem [#allocation5], %s422
        %p424 = pneg %p96
        %p425 = pneg %p93
        %s426 = sand.u32 %s30, 1
        %s427 = scalar_lea.sflag [#allocation6], %s426
        %s428 = sand.u32 %s109, 1
        %s429 = smul.addr %s428, 18
        %s430 = scalar_lea.vmem [#allocation7], %s429
        %p431 = pneg %p122
        %p432 = pneg %p119
        %s433 = sand.u32 %s30, 1
        %s434 = scalar_lea.sflag [#allocation9], %s433
        %s435 = sand.u32 %s135, 1
        %s436 = smul.addr %s435, 18
        %s437 = scalar_lea.vmem [#allocation8], %s436
        %p438 = pneg %p148
        %p439 = pneg %p145
        %p440 = pneg %p174
        %p441 = pneg %p171
        %p442 = pneg %p200
        %p443 = pneg %p197
        %p444 = pneg %p230
        %p445 = pneg %p227
        %s446 = sand.u32 %s217, 1
        %s447 = scalar_lea.sflag [#allocation4], %s446
        %s448 = sand.u32 %s217, 1
        %s449 = smul.addr %s448, 64
        %s450 = scalar_lea.vmem [#allocation13], %s449
        %s451 = smul.u32 4, %s37
        %s453 = smul.u32 %s37, 8
        %v454 = vld [vmem:[#allocation11] sm:$0x1]
        %v456 = vlaneseq
        %v457 = vshrl.u32 %v456, 7
        %v458 = vsub.s32 0, %v457
        %v459 = vrot.slane %v454, %v458
        %s461 = smul.addr %s453, 2
        %s462 = scalar_lea.vmem %s372, %s461 [#allocation2]
        %v463 = vld [vmem:[%s462] sm:$0x3]
        %v464 = vld [vmem:[%s462 + $0x2] sm:$0x3]
        %v465 = vld [vmem:[%s462 + $0x4] sm:$0x3]
        %v466 = vld [vmem:[%s462 + $0x6] sm:$0x3]
        %v467 = vld [vmem:[%s462 + $0x8] sm:$0x3]
        %v468 = vld [vmem:[%s462 + $0xa] sm:$0x3]
        %v469 = vld [vmem:[%s462 + $0xc] sm:$0x3]
        %v470 = vld [vmem:[%s462 + $0xe] sm:$0x3]
        %v471 = vld [vmem:[%s462 + $0x10] sm:$0x3]
        %v472 = vld [vmem:[#allocation10] sm:$0xf]
        %v473 = vld [vmem:[#allocation10 + $0x4] sm:$0xf]
        %v482 = vcombine.low %v463, %v464
        %v483 = vcombine.low %v465, %v466
        %v485 = vunpack.c.l.s4 1983009808
        %v486 = vunpack.c.0.s8 %v485
        %v487 = vlaneseq
        %v488 = vshrl.u32 %v487, 7
        %v489 = vsub.s32 %v486, %v488
        %v490 = vrot.slane %v482, %v489
        %v492 = vunpack.c.l.s4 1983009808
        %v493 = vunpack.c.0.s8 %v492
        %v494 = vlaneseq
        %v495 = vshrl.u32 %v494, 7
        %v496 = vsub.s32 %v493, %v495
        %v497 = vrot.slane %v483, %v496
        %v498 = vcombine.low %v490, %v497
        %v499 = vcombine.low %v467, %v468
        %v500 = vcombine.low %v469, %v470
        %v502 = vunpack.c.l.s4 1983009808
        %v503 = vunpack.c.0.s8 %v502
        %v504 = vlaneseq
        %v505 = vshrl.u32 %v504, 7
        %v506 = vsub.s32 %v503, %v505
        %v507 = vrot.slane %v499, %v506
        %v509 = vunpack.c.l.s4 1983009808
        %v510 = vunpack.c.0.s8 %v509
        %v511 = vlaneseq
        %v512 = vshrl.u32 %v511, 7
        %v513 = vsub.s32 %v510, %v512
        %v514 = vrot.slane %v500, %v513
        %v515 = vcombine.low %v507, %v514
        %v518 = vunpack.c.l.b16 %v472
        %v519 = vunpack.c.l.b16 %v473
        %v520 = vpack.c.b16 %v519, %v518
        %vm522 = vcmask 130048
        %v524 = vsel %vm522, %v498, 0
        %v527 = vsel %vm522, %v515, 0
        %529 = vmatprep.subr.bf16.mxu0 0
        %530 = vmatpush1.bf16.msra.mxu0 %v520
        %531 = vmatprep.subr.bf16.mxu0 0
        %532 = vmatpush1.bf16.msra.mxu0 0
        %533 = vmatprep.subr.bf16.mxu0 0
        %534 = vmatpush1.bf16.msra.mxu0 0
        %535 = vmatprep.subr.bf16.mxu0 0
        %536 = vmatpush1.bf16.msra.mxu0 0
        %537 = vmatprep.subr.bf16.mxu0 0
        %538 = vmatpush1.bf16.msra.mxu0 0
        %539 = vmatprep.subr.bf16.mxu0 0
        %540 = vmatpush1.bf16.msra.mxu0 0
        %541 = vmatprep.subr.bf16.mxu0 0
        %542 = vmatpush1.bf16.msra.mxu0 0
        %543 = vmatprep.subr.bf16.mxu0 0
        %544 = vmatpush1.bf16.msra.mxu0 0
        %545 = vmatprep.subr.bf16.mxu0 0
        %546 = vmatpush1.bf16.msra.mxu0 0
        %547 = vmatprep.subr.bf16.mxu0 0
        %548 = vmatpush1.bf16.msra.mxu0 0
        %549 = vmatprep.subr.bf16.mxu0 0
        %550 = vmatpush1.bf16.msra.mxu0 0
        %551 = vmatprep.subr.bf16.mxu0 0
        %552 = vmatpush1.bf16.msra.mxu0 0
        %553 = vmatprep.subr.bf16.mxu0 0
        %554 = vmatpush1.bf16.msra.mxu0 0
        %555 = vmatprep.subr.bf16.mxu0 0
        %556 = vmatpush1.bf16.msra.mxu0 0
        %557 = vmatprep.subr.bf16.mxu0 0
        %558 = vmatpush1.bf16.msra.mxu0 0
        %559 = vmatprep.subr.bf16.mxu0 0
        %560 = vmatpush1.bf16.msra.mxu0 0
        %561 = vmatprep.mubr.bf16.mxu0 0
        %562 = vmatmul.mubr.bf16.gmra.mrb[0].mxu0 %v524
        %v563 = vpop.f32.mrb[0].mxu0
        %v564 = vadd.f32 0.0, %v563
        %v565 = vpop.f32.mrb[0].mxu0
        %v566 = vpop.f32.mrb[0].mxu0
        %v567 = vadd.f32 0.0, %v566
        %v568 = vpop.f32.mrb[0].mxu0
        %569 = vmatprep.mubr.bf16.mxu0 0
        %570 = vmatmul.mubr.bf16.gmra.mrb[0].mxu0 %v527
        %v571 = vpop.f32.mrb[0].mxu0
        %v572 = vadd.f32 0.0, %v571
        %v573 = vpop.f32.mrb[0].mxu0
        %v574 = vpop.f32.mrb[0].mxu0
        %v575 = vadd.f32 0.0, %v574
        %v576 = vpop.f32.mrb[0].mxu0
        %577 = vdwg.mxu0
        %v578 = vadd.f32 %v459, %v564
        %v579 = vadd.f32 %v459, %v567
        %v580 = vadd.f32 %v459, %v572
        %v581 = vadd.f32 %v459, %v575
        %s582 = scalar_lea.vmem [#allocation10], 16
        %v583 = vld [vmem:[%s582] sm:$0xf]
        %v584 = vld [vmem:[%s582 + $0x4] sm:$0xf]
        %v586 = vcombine.low %v464, %v465
        %v587 = vcombine.low %v466, %v467
        %v589 = vunpack.c.l.s4 1983009808
        %v590 = vunpack.c.0.s8 %v589
        %v591 = vlaneseq
        %v592 = vshrl.u32 %v591, 7
        %v593 = vsub.s32 %v590, %v592
        %v594 = vrot.slane %v586, %v593
        %v596 = vunpack.c.l.s4 1983009808
        %v597 = vunpack.c.0.s8 %v596
        %v598 = vlaneseq
        %v599 = vshrl.u32 %v598, 7
        %v600 = vsub.s32 %v597, %v599
        %v601 = vrot.slane %v587, %v600
        %v602 = vcombine.low %v594, %v601
        %v603 = vcombine.low %v468, %v469
        %v604 = vcombine.low %v470, %v471
        %v606 = vunpack.c.l.s4 1983009808
        %v607 = vunpack.c.0.s8 %v606
        %v608 = vlaneseq
        %v609 = vshrl.u32 %v608, 7
        %v610 = vsub.s32 %v607, %v609
        %v611 = vrot.slane %v603, %v610
        %v613 = vunpack.c.l.s4 1983009808
        %v614 = vunpack.c.0.s8 %v613
        %v615 = vlaneseq
        %v616 = vshrl.u32 %v615, 7
        %v617 = vsub.s32 %v614, %v616
        %v618 = vrot.slane %v604, %v617
        %v619 = vcombine.low %v611, %v618
        %v622 = vunpack.c.l.b16 %v583
        %v623 = vunpack.c.l.b16 %v584
        %v624 = vpack.c.b16 %v623, %v622
        %v627 = vsel %vm522, %v602, 0
        %v630 = vsel %vm522, %v619, 0
        %632 = vmatprep.subr.bf16.mxu0 0
        %633 = vmatpush1.bf16.msra.mxu0 %v624
        %634 = vmatprep.subr.bf16.mxu0 0
        %635 = vmatpush1.bf16.msra.mxu0 0
        %636 = vmatprep.subr.bf16.mxu0 0
        %637 = vmatpush1.bf16.msra.mxu0 0
        %638 = vmatprep.subr.bf16.mxu0 0
        %639 = vmatpush1.bf16.msra.mxu0 0
        %640 = vmatprep.subr.bf16.mxu0 0
        %641 = vmatpush1.bf16.msra.mxu0 0
        %642 = vmatprep.subr.bf16.mxu0 0
        %643 = vmatpush1.bf16.msra.mxu0 0
        %644 = vmatprep.subr.bf16.mxu0 0
        %645 = vmatpush1.bf16.msra.mxu0 0
        %646 = vmatprep.subr.bf16.mxu0 0
        %647 = vmatpush1.bf16.msra.mxu0 0
        %648 = vmatprep.subr.bf16.mxu0 0
        %649 = vmatpush1.bf16.msra.mxu0 0
        %650 = vmatprep.subr.bf16.mxu0 0
        %651 = vmatpush1.bf16.msra.mxu0 0
        %652 = vmatprep.subr.bf16.mxu0 0
        %653 = vmatpush1.bf16.msra.mxu0 0
        %654 = vmatprep.subr.bf16.mxu0 0
        %655 = vmatpush1.bf16.msra.mxu0 0
        %656 = vmatprep.subr.bf16.mxu0 0
        %657 = vmatpush1.bf16.msra.mxu0 0
        %658 = vmatprep.subr.bf16.mxu0 0
        %659 = vmatpush1.bf16.msra.mxu0 0
        %660 = vmatprep.subr.bf16.mxu0 0
        %661 = vmatpush1.bf16.msra.mxu0 0
        %662 = vmatprep.subr.bf16.mxu0 0
        %663 = vmatpush1.bf16.msra.mxu0 0
        %664 = vmatprep.mubr.bf16.mxu0 0
        %665 = vmatmul.mubr.bf16.gmra.mrb[0].mxu0 %v627
        %v666 = vpop.f32.mrb[0].mxu0
        %v667 = vadd.f32 0.0, %v666
        %v668 = vpop.f32.mrb[0].mxu0
        %v669 = vpop.f32.mrb[0].mxu0
        %v670 = vadd.f32 0.0, %v669
        %v671 = vpop.f32.mrb[0].mxu0
        %672 = vmatprep.mubr.bf16.mxu0 0
        %673 = vmatmul.mubr.bf16.gmra.mrb[0].mxu0 %v630
        %v674 = vpop.f32.mrb[0].mxu0
        %v675 = vadd.f32 0.0, %v674
        %v676 = vpop.f32.mrb[0].mxu0
        %v677 = vpop.f32.mrb[0].mxu0
        %v678 = vadd.f32 0.0, %v677
        %v679 = vpop.f32.mrb[0].mxu0
        %680 = vdwg.mxu0
        %v681 = vadd.f32 %v578, %v667
        %v682 = vadd.f32 %v579, %v670
        %v683 = vadd.f32 %v580, %v675
        %v684 = vadd.f32 %v581, %v678
        %s685 = smul.addr %s453, 2
        %s686 = scalar_lea.vmem %s381, %s685 [#allocation5]
        %v687 = vld [vmem:[%s686] sm:$0x3]
        %v688 = vld [vmem:[%s686 + $0x2] sm:$0x3]
        %v689 = vld [vmem:[%s686 + $0x4] sm:$0x3]
        %v690 = vld [vmem:[%s686 + $0x6] sm:$0x3]
        %v691 = vld [vmem:[%s686 + $0x8] sm:$0x3]
        %v692 = vld [vmem:[%s686 + $0xa] sm:$0x3]
        %v693 = vld [vmem:[%s686 + $0xc] sm:$0x3]
        %v694 = vld [vmem:[%s686 + $0xe] sm:$0x3]
        %v695 = vld [vmem:[%s686 + $0x10] sm:$0x3]
        %v704 = vcombine.low %v687, %v688
        %v705 = vcombine.low %v689, %v690
        %v707 = vunpack.c.l.s4 1983009808
        %v708 = vunpack.c.0.s8 %v707
        %v709 = vlaneseq
        %v710 = vshrl.u32 %v709, 7
        %v711 = vsub.s32 %v708, %v710
        %v712 = vrot.slane %v704, %v711
        %v714 = vunpack.c.l.s4 1983009808
        %v715 = vunpack.c.0.s8 %v714
        %v716 = vlaneseq
        %v717 = vshrl.u32 %v716, 7
        %v718 = vsub.s32 %v715, %v717
        %v719 = vrot.slane %v705, %v718
        %v720 = vcombine.low %v712, %v719
        %v721 = vcombine.low %v691, %v692
        %v722 = vcombine.low %v693, %v694
        %v724 = vunpack.c.l.s4 1983009808
        %v725 = vunpack.c.0.s8 %v724
        %v726 = vlaneseq
        %v727 = vshrl.u32 %v726, 7
        %v728 = vsub.s32 %v725, %v727
        %v729 = vrot.slane %v721, %v728
        %v731 = vunpack.c.l.s4 1983009808
        %v732 = vunpack.c.0.s8 %v731
        %v733 = vlaneseq
        %v734 = vshrl.u32 %v733, 7
        %v735 = vsub.s32 %v732, %v734
        %v736 = vrot.slane %v722, %v735
        %v737 = vcombine.low %v729, %v736
        %v739 = vsel %vm522, %v720, 0
        %v742 = vsel %vm522, %v737, 0
        %744 = vmatprep.subr.bf16.mxu0 0
        %745 = vmatpush1.bf16.msra.mxu0 %v520
        %746 = vmatprep.subr.bf16.mxu0 0
        %747 = vmatpush1.bf16.msra.mxu0 0
        %748 = vmatprep.subr.bf16.mxu0 0
        %749 = vmatpush1.bf16.msra.mxu0 0
        %750 = vmatprep.subr.bf16.mxu0 0
        %751 = vmatpush1.bf16.msra.mxu0 0
        %752 = vmatprep.subr.bf16.mxu0 0
        %753 = vmatpush1.bf16.msra.mxu0 0
        %754 = vmatprep.subr.bf16.mxu0 0
        %755 = vmatpush1.bf16.msra.mxu0 0
        %756 = vmatprep.subr.bf16.mxu0 0
        %757 = vmatpush1.bf16.msra.mxu0 0
        %758 = vmatprep.subr.bf16.mxu0 0
        %759 = vmatpush1.bf16.msra.mxu0 0
        %760 = vmatprep.subr.bf16.mxu0 0
        %761 = vmatpush1.bf16.msra.mxu0 0
        %762 = vmatprep.subr.bf16.mxu0 0
        %763 = vmatpush1.bf16.msra.mxu0 0
        %764 = vmatprep.subr.bf16.mxu0 0
        %765 = vmatpush1.bf16.msra.mxu0 0
        %766 = vmatprep.subr.bf16.mxu0 0
        %767 = vmatpush1.bf16.msra.mxu0 0
        %768 = vmatprep.subr.bf16.mxu0 0
        %769 = vmatpush1.bf16.msra.mxu0 0
        %770 = vmatprep.subr.bf16.mxu0 0
        %771 = vmatpush1.bf16.msra.mxu0 0
        %772 = vmatprep.subr.bf16.mxu0 0
        %773 = vmatpush1.bf16.msra.mxu0 0
        %774 = vmatprep.subr.bf16.mxu0 0
        %775 = vmatpush1.bf16.msra.mxu0 0
        %776 = vmatprep.mubr.bf16.mxu0 0
        %777 = vmatmul.mubr.bf16.gmra.mrb[0].mxu0 %v739
        %v778 = vpop.f32.mrb[0].mxu0
        %v779 = vadd.f32 0.0, %v778
        %v780 = vpop.f32.mrb[0].mxu0
        %v781 = vpop.f32.mrb[0].mxu0
        %v782 = vadd.f32 0.0, %v781
        %v783 = vpop.f32.mrb[0].mxu0
        %784 = vmatprep.mubr.bf16.mxu0 0
        %785 = vmatmul.mubr.bf16.gmra.mrb[0].mxu0 %v742
        %v786 = vpop.f32.mrb[0].mxu0
        %v787 = vadd.f32 0.0, %v786
        %v788 = vpop.f32.mrb[0].mxu0
        %v789 = vpop.f32.mrb[0].mxu0
        %v790 = vadd.f32 0.0, %v789
        %v791 = vpop.f32.mrb[0].mxu0
        %792 = vdwg.mxu0
        %v793 = vadd.f32 %v459, %v779
        %v794 = vadd.f32 %v459, %v782
        %v795 = vadd.f32 %v459, %v787
        %v796 = vadd.f32 %v459, %v790
        %v798 = vcombine.low %v688, %v689
        %v799 = vcombine.low %v690, %v691
        %v801 = vunpack.c.l.s4 1983009808
        %v802 = vunpack.c.0.s8 %v801
        %v803 = vlaneseq
        %v804 = vshrl.u32 %v803, 7
        %v805 = vsub.s32 %v802, %v804
        %v806 = vrot.slane %v798, %v805
        %v808 = vunpack.c.l.s4 1983009808
        %v809 = vunpack.c.0.s8 %v808
        %v810 = vlaneseq
        %v811 = vshrl.u32 %v810, 7
        %v812 = vsub.s32 %v809, %v811
        %v813 = vrot.slane %v799, %v812
        %v814 = vcombine.low %v806, %v813
        %v815 = vcombine.low %v692, %v693
        %v816 = vcombine.low %v694, %v695
        %v818 = vunpack.c.l.s4 1983009808
        %v819 = vunpack.c.0.s8 %v818
        %v820 = vlaneseq
        %v821 = vshrl.u32 %v820, 7
        %v822 = vsub.s32 %v819, %v821
        %v823 = vrot.slane %v815, %v822
        %v825 = vunpack.c.l.s4 1983009808
        %v826 = vunpack.c.0.s8 %v825
        %v827 = vlaneseq
        %v828 = vshrl.u32 %v827, 7
        %v829 = vsub.s32 %v826, %v828
        %v830 = vrot.slane %v816, %v829
        %v831 = vcombine.low %v823, %v830
        %v833 = vsel %vm522, %v814, 0
        %v836 = vsel %vm522, %v831, 0
        %838 = vmatprep.subr.bf16.mxu0 0
        %839 = vmatpush1.bf16.msra.mxu0 %v624
        %840 = vmatprep.subr.bf16.mxu0 0
        %841 = vmatpush1.bf16.msra.mxu0 0
        %842 = vmatprep.subr.bf16.mxu0 0
        %843 = vmatpush1.bf16.msra.mxu0 0
        %844 = vmatprep.subr.bf16.mxu0 0
        %845 = vmatpush1.bf16.msra.mxu0 0
        %846 = vmatprep.subr.bf16.mxu0 0
        %847 = vmatpush1.bf16.msra.mxu0 0
        %848 = vmatprep.subr.bf16.mxu0 0
        %849 = vmatpush1.bf16.msra.mxu0 0
        %850 = vmatprep.subr.bf16.mxu0 0
        %851 = vmatpush1.bf16.msra.mxu0 0
        %852 = vmatprep.subr.bf16.mxu0 0
        %853 = vmatpush1.bf16.msra.mxu0 0
        %854 = vmatprep.subr.bf16.mxu0 0
        %855 = vmatpush1.bf16.msra.mxu0 0
        %856 = vmatprep.subr.bf16.mxu0 0
        %857 = vmatpush1.bf16.msra.mxu0 0
        %858 = vmatprep.subr.bf16.mxu0 0
        %859 = vmatpush1.bf16.msra.mxu0 0
        %860 = vmatprep.subr.bf16.mxu0 0
        %861 = vmatpush1.bf16.msra.mxu0 0
        %862 = vmatprep.subr.bf16.mxu0 0
        %863 = vmatpush1.bf16.msra.mxu0 0
        %864 = vmatprep.subr.bf16.mxu0 0
        %865 = vmatpush1.bf16.msra.mxu0 0
        %866 = vmatprep.subr.bf16.mxu0 0
        %867 = vmatpush1.bf16.msra.mxu0 0
        %868 = vmatprep.subr.bf16.mxu0 0
        %869 = vmatpush1.bf16.msra.mxu0 0
        %870 = vmatprep.mubr.bf16.mxu0 0
        %871 = vmatmul.mubr.bf16.gmra.mrb[0].mxu0 %v833
        %v872 = vpop.f32.mrb[0].mxu0
        %v873 = vadd.f32 0.0, %v872
        %v874 = vpop.f32.mrb[0].mxu0
        %v875 = vpop.f32.mrb[0].mxu0
        %v876 = vadd.f32 0.0, %v875
        %v877 = vpop.f32.mrb[0].mxu0
        %878 = vmatprep.mubr.bf16.mxu0 0
        %879 = vmatmul.mubr.bf16.gmra.mrb[0].mxu0 %v836
        %v880 = vpop.f32.mrb[0].mxu0
        %v881 = vadd.f32 0.0, %v880
        %v882 = vpop.f32.mrb[0].mxu0
        %v883 = vpop.f32.mrb[0].mxu0
        %v884 = vadd.f32 0.0, %v883
        %v885 = vpop.f32.mrb[0].mxu0
        %886 = vdwg.mxu0
        %v887 = vadd.f32 %v793, %v873
        %v888 = vadd.f32 %v794, %v876
        %v889 = vadd.f32 %v795, %v881
        %v890 = vadd.f32 %v796, %v884
        %s891 = smul.addr %s453, 2
        %s892 = scalar_lea.vmem %s390, %s891 [#allocation7]
        %v893 = vld [vmem:[%s892] sm:$0x3]
        %v894 = vld [vmem:[%s892 + $0x2] sm:$0x3]
        %v895 = vld [vmem:[%s892 + $0x4] sm:$0x3]
        %v896 = vld [vmem:[%s892 + $0x6] sm:$0x3]
        %v897 = vld [vmem:[%s892 + $0x8] sm:$0x3]
        %v898 = vld [vmem:[%s892 + $0xa] sm:$0x3]
        %v899 = vld [vmem:[%s892 + $0xc] sm:$0x3]
        %v900 = vld [vmem:[%s892 + $0xe] sm:$0x3]
        %v901 = vld [vmem:[%s892 + $0x10] sm:$0x3]
        %s902 = scalar_lea.vmem [#allocation10], 8
        %v903 = vld [vmem:[%s902] sm:$0xf]
        %v904 = vld [vmem:[%s902 + $0x4] sm:$0xf]
        %v913 = vcombine.low %v893, %v894
        %v914 = vcombine.low %v895, %v896
        %v916 = vunpack.c.l.s4 1983009808
        %v917 = vunpack.c.0.s8 %v916
        %v918 = vlaneseq
        %v919 = vshrl.u32 %v918, 7
        %v920 = vsub.s32 %v917, %v919
        %v921 = vrot.slane %v913, %v920
        %v923 = vunpack.c.l.s4 1983009808
        %v924 = vunpack.c.0.s8 %v923
        %v925 = vlaneseq
        %v926 = vshrl.u32 %v925, 7
        %v927 = vsub.s32 %v924, %v926
        %v928 = vrot.slane %v914, %v927
        %v929 = vcombine.low %v921, %v928
        %v930 = vcombine.low %v897, %v898
        %v931 = vcombine.low %v899, %v900
        %v933 = vunpack.c.l.s4 1983009808
        %v934 = vunpack.c.0.s8 %v933
        %v935 = vlaneseq
        %v936 = vshrl.u32 %v935, 7
        %v937 = vsub.s32 %v934, %v936
        %v938 = vrot.slane %v930, %v937
        %v940 = vunpack.c.l.s4 1983009808
        %v941 = vunpack.c.0.s8 %v940
        %v942 = vlaneseq
        %v943 = vshrl.u32 %v942, 7
        %v944 = vsub.s32 %v941, %v943
        %v945 = vrot.slane %v931, %v944
        %v946 = vcombine.low %v938, %v945
        %v949 = vunpack.c.l.b16 %v903
        %v950 = vunpack.c.l.b16 %v904
        %v951 = vpack.c.b16 %v950, %v949
        %v954 = vsel %vm522, %v929, 0
        %v957 = vsel %vm522, %v946, 0
        %959 = vmatprep.subr.bf16.mxu0 0
        %960 = vmatpush1.bf16.msra.mxu0 %v951
        %961 = vmatprep.subr.bf16.mxu0 0
        %962 = vmatpush1.bf16.msra.mxu0 0
        %963 = vmatprep.subr.bf16.mxu0 0
        %964 = vmatpush1.bf16.msra.mxu0 0
        %965 = vmatprep.subr.bf16.mxu0 0
        %966 = vmatpush1.bf16.msra.mxu0 0
        %967 = vmatprep.subr.bf16.mxu0 0
        %968 = vmatpush1.bf16.msra.mxu0 0
        %969 = vmatprep.subr.bf16.mxu0 0
        %970 = vmatpush1.bf16.msra.mxu0 0
        %971 = vmatprep.subr.bf16.mxu0 0
        %972 = vmatpush1.bf16.msra.mxu0 0
        %973 = vmatprep.subr.bf16.mxu0 0
        %974 = vmatpush1.bf16.msra.mxu0 0
        %975 = vmatprep.subr.bf16.mxu0 0
        %976 = vmatpush1.bf16.msra.mxu0 0
        %977 = vmatprep.subr.bf16.mxu0 0
        %978 = vmatpush1.bf16.msra.mxu0 0
        %979 = vmatprep.subr.bf16.mxu0 0
        %980 = vmatpush1.bf16.msra.mxu0 0
        %981 = vmatprep.subr.bf16.mxu0 0
        %982 = vmatpush1.bf16.msra.mxu0 0
        %983 = vmatprep.subr.bf16.mxu0 0
        %984 = vmatpush1.bf16.msra.mxu0 0
        %985 = vmatprep.subr.bf16.mxu0 0
        %986 = vmatpush1.bf16.msra.mxu0 0
        %987 = vmatprep.subr.bf16.mxu0 0
        %988 = vmatpush1.bf16.msra.mxu0 0
        %989 = vmatprep.subr.bf16.mxu0 0
        %990 = vmatpush1.bf16.msra.mxu0 0
        %991 = vmatprep.mubr.bf16.mxu0 0
        %992 = vmatmul.mubr.bf16.gmra.mrb[0].mxu0 %v954
        %v993 = vpop.f32.mrb[0].mxu0
        %v994 = vadd.f32 0.0, %v993
        %v995 = vpop.f32.mrb[0].mxu0
        %v996 = vpop.f32.mrb[0].mxu0
        %v997 = vadd.f32 0.0, %v996
        %v998 = vpop.f32.mrb[0].mxu0
        %999 = vmatprep.mubr.bf16.mxu0 0
        %1000 = vmatmul.mubr.bf16.gmra.mrb[0].mxu0 %v957
        %v1001 = vpop.f32.mrb[0].mxu0
        %v1002 = vadd.f32 0.0, %v1001
        %v1003 = vpop.f32.mrb[0].mxu0
        %v1004 = vpop.f32.mrb[0].mxu0
        %v1005 = vadd.f32 0.0, %v1004
        %v1006 = vpop.f32.mrb[0].mxu0
        %1007 = vdwg.mxu0
        %v1008 = vadd.f32 %v681, %v994
        %v1009 = vadd.f32 %v682, %v997
        %v1010 = vadd.f32 %v683, %v1002
        %v1011 = vadd.f32 %v684, %v1005
        %s1012 = scalar_lea.vmem [#allocation10], 24
        %v1013 = vld [vmem:[%s1012] sm:$0xf]
        %v1014 = vld [vmem:[%s1012 + $0x4] sm:$0xf]
        %v1016 = vcombine.low %v894, %v895
        %v1017 = vcombine.low %v896, %v897
        %v1019 = vunpack.c.l.s4 1983009808
        %v1020 = vunpack.c.0.s8 %v1019
        %v1021 = vlaneseq
        %v1022 = vshrl.u32 %v1021, 7
        %v1023 = vsub.s32 %v1020, %v1022
        %v1024 = vrot.slane %v1016, %v1023
        %v1026 = vunpack.c.l.s4 1983009808
        %v1027 = vunpack.c.0.s8 %v1026
        %v1028 = vlaneseq
        %v1029 = vshrl.u32 %v1028, 7
        %v1030 = vsub.s32 %v1027, %v1029
        %v1031 = vrot.slane %v1017, %v1030
        %v1032 = vcombine.low %v1024, %v1031
        %v1033 = vcombine.low %v898, %v899
        %v1034 = vcombine.low %v900, %v901
        %v1036 = vunpack.c.l.s4 1983009808
        %v1037 = vunpack.c.0.s8 %v1036
        %v1038 = vlaneseq
        %v1039 = vshrl.u32 %v1038, 7
        %v1040 = vsub.s32 %v1037, %v1039
        %v1041 = vrot.slane %v1033, %v1040
        %v1043 = vunpack.c.l.s4 1983009808
        %v1044 = vunpack.c.0.s8 %v1043
        %v1045 = vlaneseq
        %v1046 = vshrl.u32 %v1045, 7
        %v1047 = vsub.s32 %v1044, %v1046
        %v1048 = vrot.slane %v1034, %v1047
        %v1049 = vcombine.low %v1041, %v1048
        %v1052 = vunpack.c.l.b16 %v1013
        %v1053 = vunpack.c.l.b16 %v1014
        %v1054 = vpack.c.b16 %v1053, %v1052
        %v1057 = vsel %vm522, %v1032, 0
        %v1060 = vsel %vm522, %v1049, 0
        %1062 = vmatprep.subr.bf16.mxu0 0
        %1063 = vmatpush1.bf16.msra.mxu0 %v1054
        %1064 = vmatprep.subr.bf16.mxu0 0
        %1065 = vmatpush1.bf16.msra.mxu0 0
        %1066 = vmatprep.subr.bf16.mxu0 0
        %1067 = vmatpush1.bf16.msra.mxu0 0
        %1068 = vmatprep.subr.bf16.mxu0 0
        %1069 = vmatpush1.bf16.msra.mxu0 0
        %1070 = vmatprep.subr.bf16.mxu0 0
        %1071 = vmatpush1.bf16.msra.mxu0 0
        %1072 = vmatprep.subr.bf16.mxu0 0
        %1073 = vmatpush1.bf16.msra.mxu0 0
        %1074 = vmatprep.subr.bf16.mxu0 0
        %1075 = vmatpush1.bf16.msra.mxu0 0
        %1076 = vmatprep.subr.bf16.mxu0 0
        %1077 = vmatpush1.bf16.msra.mxu0 0
        %1078 = vmatprep.subr.bf16.mxu0 0
        %1079 = vmatpush1.bf16.msra.mxu0 0
        %1080 = vmatprep.subr.bf16.mxu0 0
        %1081 = vmatpush1.bf16.msra.mxu0 0
        %1082 = vmatprep.subr.bf16.mxu0 0
        %1083 = vmatpush1.bf16.msra.mxu0 0
        %1084 = vmatprep.subr.bf16.mxu0 0
        %1085 = vmatpush1.bf16.msra.mxu0 0
        %1086 = vmatprep.subr.bf16.mxu0 0
        %1087 = vmatpush1.bf16.msra.mxu0 0
        %1088 = vmatprep.subr.bf16.mxu0 0
        %1089 = vmatpush1.bf16.msra.mxu0 0
        %1090 = vmatprep.subr.bf16.mxu0 0
        %1091 = vmatpush1.bf16.msra.mxu0 0
        %1092 = vmatprep.subr.bf16.mxu0 0
        %1093 = vmatpush1.bf16.msra.mxu0 0
        %1094 = vmatprep.mubr.bf16.mxu0 0
        %1095 = vmatmul.mubr.bf16.gmra.mrb[0].mxu0 %v1057
        %v1096 = vpop.f32.mrb[0].mxu0
        %v1097 = vadd.f32 0.0, %v1096
        %v1098 = vpop.f32.mrb[0].mxu0
        %v1099 = vpop.f32.mrb[0].mxu0
        %v1100 = vadd.f32 0.0, %v1099
        %v1101 = vpop.f32.mrb[0].mxu0
        %1102 = vmatprep.mubr.bf16.mxu0 0
        %1103 = vmatmul.mubr.bf16.gmra.mrb[0].mxu0 %v1060
        %v1104 = vpop.f32.mrb[0].mxu0
        %v1105 = vadd.f32 0.0, %v1104
        %v1106 = vpop.f32.mrb[0].mxu0
        %v1107 = vpop.f32.mrb[0].mxu0
        %v1108 = vadd.f32 0.0, %v1107
        %v1109 = vpop.f32.mrb[0].mxu0
        %1110 = vdwg.mxu0
        %v1111 = vadd.f32 %v1008, %v1097
        %v1112 = vadd.f32 %v1009, %v1100
        %v1113 = vadd.f32 %v1010, %v1105
        %v1114 = vadd.f32 %v1011, %v1108
        %s1115 = smul.addr %s453, 2
        %s1116 = scalar_lea.vmem %s399, %s1115 [#allocation8]
        %v1117 = vld [vmem:[%s1116] sm:$0x3]
        %v1118 = vld [vmem:[%s1116 + $0x2] sm:$0x3]
        %v1119 = vld [vmem:[%s1116 + $0x4] sm:$0x3]
        %v1120 = vld [vmem:[%s1116 + $0x6] sm:$0x3]
        %v1121 = vld [vmem:[%s1116 + $0x8] sm:$0x3]
        %v1122 = vld [vmem:[%s1116 + $0xa] sm:$0x3]
        %v1123 = vld [vmem:[%s1116 + $0xc] sm:$0x3]
        %v1124 = vld [vmem:[%s1116 + $0xe] sm:$0x3]
        %v1125 = vld [vmem:[%s1116 + $0x10] sm:$0x3]
        %v1134 = vcombine.low %v1117, %v1118
        %v1135 = vcombine.low %v1119, %v1120
        %v1137 = vunpack.c.l.s4 1983009808
        %v1138 = vunpack.c.0.s8 %v1137
        %v1139 = vlaneseq
        %v1140 = vshrl.u32 %v1139, 7
        %v1141 = vsub.s32 %v1138, %v1140
        %v1142 = vrot.slane %v1134, %v1141
        %v1144 = vunpack.c.l.s4 1983009808
        %v1145 = vunpack.c.0.s8 %v1144
        %v1146 = vlaneseq
        %v1147 = vshrl.u32 %v1146, 7
        %v1148 = vsub.s32 %v1145, %v1147
        %v1149 = vrot.slane %v1135, %v1148
        %v1150 = vcombine.low %v1142, %v1149
        %v1151 = vcombine.low %v1121, %v1122
        %v1152 = vcombine.low %v1123, %v1124
        %v1154 = vunpack.c.l.s4 1983009808
        %v1155 = vunpack.c.0.s8 %v1154
        %v1156 = vlaneseq
        %v1157 = vshrl.u32 %v1156, 7
        %v1158 = vsub.s32 %v1155, %v1157
        %v1159 = vrot.slane %v1151, %v1158
        %v1161 = vunpack.c.l.s4 1983009808
        %v1162 = vunpack.c.0.s8 %v1161
        %v1163 = vlaneseq
        %v1164 = vshrl.u32 %v1163, 7
        %v1165 = vsub.s32 %v1162, %v1164
        %v1166 = vrot.slane %v1152, %v1165
        %v1167 = vcombine.low %v1159, %v1166
        %v1169 = vsel %vm522, %v1150, 0
        %v1172 = vsel %vm522, %v1167, 0
        %1174 = vmatprep.subr.bf16.mxu0 0
        %1175 = vmatpush1.bf16.msra.mxu0 %v951
        %1176 = vmatprep.subr.bf16.mxu0 0
        %1177 = vmatpush1.bf16.msra.mxu0 0
        %1178 = vmatprep.subr.bf16.mxu0 0
        %1179 = vmatpush1.bf16.msra.mxu0 0
        %1180 = vmatprep.subr.bf16.mxu0 0
        %1181 = vmatpush1.bf16.msra.mxu0 0
        %1182 = vmatprep.subr.bf16.mxu0 0
        %1183 = vmatpush1.bf16.msra.mxu0 0
        %1184 = vmatprep.subr.bf16.mxu0 0
        %1185 = vmatpush1.bf16.msra.mxu0 0
        %1186 = vmatprep.subr.bf16.mxu0 0
        %1187 = vmatpush1.bf16.msra.mxu0 0
        %1188 = vmatprep.subr.bf16.mxu0 0
        %1189 = vmatpush1.bf16.msra.mxu0 0
        %1190 = vmatprep.subr.bf16.mxu0 0
        %1191 = vmatpush1.bf16.msra.mxu0 0
        %1192 = vmatprep.subr.bf16.mxu0 0
        %1193 = vmatpush1.bf16.msra.mxu0 0
        %1194 = vmatprep.subr.bf16.mxu0 0
        %1195 = vmatpush1.bf16.msra.mxu0 0
        %1196 = vmatprep.subr.bf16.mxu0 0
        %1197 = vmatpush1.bf16.msra.mxu0 0
        %1198 = vmatprep.subr.bf16.mxu0 0
        %1199 = vmatpush1.bf16.msra.mxu0 0
        %1200 = vmatprep.subr.bf16.mxu0 0
        %1201 = vmatpush1.bf16.msra.mxu0 0
        %1202 = vmatprep.subr.bf16.mxu0 0
        %1203 = vmatpush1.bf16.msra.mxu0 0
        %1204 = vmatprep.subr.bf16.mxu0 0
        %1205 = vmatpush1.bf16.msra.mxu0 0
        %1206 = vmatprep.mubr.bf16.mxu0 0
        %1207 = vmatmul.mubr.bf16.gmra.mrb[0].mxu0 %v1169
        %v1208 = vpop.f32.mrb[0].mxu0
        %v1209 = vadd.f32 0.0, %v1208
        %v1210 = vpop.f32.mrb[0].mxu0
        %v1211 = vpop.f32.mrb[0].mxu0
        %v1212 = vadd.f32 0.0, %v1211
        %v1213 = vpop.f32.mrb[0].mxu0
        %1214 = vmatprep.mubr.bf16.mxu0 0
        %1215 = vmatmul.mubr.bf16.gmra.mrb[0].mxu0 %v1172
        %v1216 = vpop.f32.mrb[0].mxu0
        %v1217 = vadd.f32 0.0, %v1216
        %v1218 = vpop.f32.mrb[0].mxu0
        %v1219 = vpop.f32.mrb[0].mxu0
        %v1220 = vadd.f32 0.0, %v1219
        %v1221 = vpop.f32.mrb[0].mxu0
        %1222 = vdwg.mxu0
        %v1223 = vadd.f32 %v887, %v1209
        %v1224 = vadd.f32 %v888, %v1212
        %v1225 = vadd.f32 %v889, %v1217
        %v1226 = vadd.f32 %v890, %v1220
        %v1228 = vcombine.low %v1118, %v1119
        %v1229 = vcombine.low %v1120, %v1121
        %v1231 = vunpack.c.l.s4 1983009808
        %v1232 = vunpack.c.0.s8 %v1231
        %v1233 = vlaneseq
        %v1234 = vshrl.u32 %v1233, 7
        %v1235 = vsub.s32 %v1232, %v1234
        %v1236 = vrot.slane %v1228, %v1235
        %v1238 = vunpack.c.l.s4 1983009808
        %v1239 = vunpack.c.0.s8 %v1238
        %v1240 = vlaneseq
        %v1241 = vshrl.u32 %v1240, 7
        %v1242 = vsub.s32 %v1239, %v1241
        %v1243 = vrot.slane %v1229, %v1242
        %v1244 = vcombine.low %v1236, %v1243
        %v1245 = vcombine.low %v1122, %v1123
        %v1246 = vcombine.low %v1124, %v1125
        %v1248 = vunpack.c.l.s4 1983009808
        %v1249 = vunpack.c.0.s8 %v1248
        %v1250 = vlaneseq
        %v1251 = vshrl.u32 %v1250, 7
        %v1252 = vsub.s32 %v1249, %v1251
        %v1253 = vrot.slane %v1245, %v1252
        %v1255 = vunpack.c.l.s4 1983009808
        %v1256 = vunpack.c.0.s8 %v1255
        %v1257 = vlaneseq
        %v1258 = vshrl.u32 %v1257, 7
        %v1259 = vsub.s32 %v1256, %v1258
        %v1260 = vrot.slane %v1246, %v1259
        %v1261 = vcombine.low %v1253, %v1260
        %v1263 = vsel %vm522, %v1244, 0
        %v1266 = vsel %vm522, %v1261, 0
        %1268 = vmatprep.subr.bf16.mxu0 0
        %1269 = vmatpush1.bf16.msra.mxu0 %v1054
        %1270 = vmatprep.subr.bf16.mxu0 0
        %1271 = vmatpush1.bf16.msra.mxu0 0
        %1272 = vmatprep.subr.bf16.mxu0 0
        %1273 = vmatpush1.bf16.msra.mxu0 0
        %1274 = vmatprep.subr.bf16.mxu0 0
        %1275 = vmatpush1.bf16.msra.mxu0 0
        %1276 = vmatprep.subr.bf16.mxu0 0
        %1277 = vmatpush1.bf16.msra.mxu0 0
        %1278 = vmatprep.subr.bf16.mxu0 0
        %1279 = vmatpush1.bf16.msra.mxu0 0
        %1280 = vmatprep.subr.bf16.mxu0 0
        %1281 = vmatpush1.bf16.msra.mxu0 0
        %1282 = vmatprep.subr.bf16.mxu0 0
        %1283 = vmatpush1.bf16.msra.mxu0 0
        %1284 = vmatprep.subr.bf16.mxu0 0
        %1285 = vmatpush1.bf16.msra.mxu0 0
        %1286 = vmatprep.subr.bf16.mxu0 0
        %1287 = vmatpush1.bf16.msra.mxu0 0
        %1288 = vmatprep.subr.bf16.mxu0 0
        %1289 = vmatpush1.bf16.msra.mxu0 0
        %1290 = vmatprep.subr.bf16.mxu0 0
        %1291 = vmatpush1.bf16.msra.mxu0 0
        %1292 = vmatprep.subr.bf16.mxu0 0
        %1293 = vmatpush1.bf16.msra.mxu0 0
        %1294 = vmatprep.subr.bf16.mxu0 0
        %1295 = vmatpush1.bf16.msra.mxu0 0
        %1296 = vmatprep.subr.bf16.mxu0 0
        %1297 = vmatpush1.bf16.msra.mxu0 0
        %1298 = vmatprep.subr.bf16.mxu0 0
        %1299 = vmatpush1.bf16.msra.mxu0 0
        %1300 = vmatprep.mubr.bf16.mxu0 0
        %1301 = vmatmul.mubr.bf16.gmra.mrb[0].mxu0 %v1263
        %v1302 = vpop.f32.mrb[0].mxu0
        %v1303 = vadd.f32 0.0, %v1302
        %v1304 = vpop.f32.mrb[0].mxu0
        %v1305 = vpop.f32.mrb[0].mxu0
        %v1306 = vadd.f32 0.0, %v1305
        %v1307 = vpop.f32.mrb[0].mxu0
        %1308 = vmatprep.mubr.bf16.mxu0 0
        %1309 = vmatmul.mubr.bf16.gmra.mrb[0].mxu0 %v1266
        %v1310 = vpop.f32.mrb[0].mxu0
        %v1311 = vadd.f32 0.0, %v1310
        %v1312 = vpop.f32.mrb[0].mxu0
        %v1313 = vpop.f32.mrb[0].mxu0
        %v1314 = vadd.f32 0.0, %v1313
        %v1315 = vpop.f32.mrb[0].mxu0
        %1316 = vdwg.mxu0
        %v1317 = vadd.f32 %v1223, %v1303
        %v1318 = vadd.f32 %v1224, %v1306
        %v1319 = vadd.f32 %v1225, %v1311
        %v1320 = vadd.f32 %v1226, %v1314
        %1321 = vst [vmem:[%s450] sm:$0xff] %v1111
        %1322 = vst [vmem:[%s450 + $0x8] sm:$0xff] %v1112
        %1323 = vst [vmem:[%s450 + $0x10] sm:$0xff] %v1113
        %1324 = vst [vmem:[%s450 + $0x18] sm:$0xff] %v1114
        %s1325 = scalar_lea.vmem %s450, 32 [#allocation13]
        %1326 = vst [vmem:[%s1325] sm:$0xff] %v1317
        %1327 = vst [vmem:[%s1325 + $0x8] sm:$0xff] %v1318
        %1328 = vst [vmem:[%s1325 + $0x10] sm:$0xff] %v1319
        %1329 = vst [vmem:[%s1325 + $0x18] sm:$0xff] %v1320
        %s1330 = sand.u32 %s217, 1
        %s1331 = scalar_lea.sflag [#allocation4], %s1330
        %s1332 = sand.u32 %s217, 1
        %s1333 = smul.addr %s1332, 64
        %s1334 = scalar_lea.vmem [#allocation13], %s1333
        // Predicated region
        $region69: #{tpu_custom_call.1} parent=43 // pred_check
          %p1335 = pneg %p227
        $region70: #{tpu_custom_call.1} parent=43 // pred_check_branch
          %1337 = sbr.rel (%p1335) target = $region72
        $region71: #{tpu_custom_call.1} parent=43 // pred_region
          %s1338 = smul.u32 4, %s37
          %s1340 = ssub.s32 1024, 1024
          %1341 = vsyncadd %s1331, %s1340
          %s1342 = sadd.s32 %s36, %s1338
          %s1343 = smul.addr %s35, 8
          %s1344 = sadd.s32 %s1342, %s1343
          %s1345 = smul.addr %s1344, 128
          %s1346 = scalar_lea.hbm %s6, %s1345
          %s1347 = sshll.u32 %s1334, 4
          %s1348 = int_to_ptr.vmem [resolvable:$true] %s1347
          %1353 = dma.vmem_to_hbm [thread:$0]  %s1348, 1024, %s1346, %s1331, 128, 128, 8
        $region72: #{tpu_custom_call.1} parent=43 // pred_fallthru
          _
      $region44: #{tpu_custom_call.1} parent=5 // pred_fallthru
        _
      %p1354 = scmp.le.s32.totalorder 2, %s25
      // Predicated region
      $region73: #{tpu_custom_call.1} parent=5 // pred_check
        %p1355 = pneg %p1354
      $region74: #{tpu_custom_call.1} parent=5 // pred_check_branch
        %1357 = sbr.rel (%p1355) target = $region76
      $region75: #{tpu_custom_call.1} parent=5 // pred_region
        %s1358 = ssub.s32 %s25, 2
        // Predicated region
        $region77: #{tpu_custom_call.1} parent=75 // pred_check
          %p1359 = pneg %p233
        $region78: #{tpu_custom_call.1} parent=75 // pred_check_branch
          %1361 = sbr.rel (%p1359) target = $region80
        $region79: #{tpu_custom_call.1} parent=75 // pred_region
          %s1362 = sand.u32 %s218, 1
          %s1363 = scalar_lea.sflag [#allocation4], %s1362
          %s1364 = sand.u32 %s218, 1
          %s1365 = smul.addr %s1364, 64
          %s1366 = scalar_lea.vmem [#allocation13], %s1365
          %1367 = dma.done %s1363, 1024
        $region80: #{tpu_custom_call.1} parent=75 // pred_fallthru
          _
      $region76: #{tpu_custom_call.1} parent=5 // pred_fallthru
        _
    $region6: #{tpu_custom_call.1} parent=1 // loop_footer
      %s29 = sadd.s32 1, %s25
    $region7: #{tpu_custom_call.1} parent=1 // loop_footer_branch
      %24 = sbr.rel target = $region3
    $region8: #{tpu_custom_call.1} parent=1 // loop_exit
      _
    %1368 = vsyncpa [#allocation3], 1
    %s1369 = scalar_lea.sflag [#allocation3], 1
    %1370 = vsyncpa %s1369, 1
    %1371 = vsyncpa [#allocation6], 1
    %s1372 = scalar_lea.sflag [#allocation6], 1
    %1373 = vsyncpa %s1372, 1
    %1374 = vsyncpa [#allocation9], 1
    %s1375 = scalar_lea.sflag [#allocation9], 1
    %1376 = vsyncpa %s1375, 1
    %1377 = vsyncpa [#allocation12], 1
    %1378 = vsyncpa [#allocation4], 1
    %s1379 = scalar_lea.sflag [#allocation4], 1
    %1380 = vsyncpa %s1379, 1

</llo_original>
